<compile_context>
chip_gen: v7x
topology: tpu7x:2x2x1
jax: 0.10.0
libtpu: 0.0.40
codegen_flags: <defaults>
</compile_context>

<pallas_src>
import functools

import jax
import jax.numpy as jnp
from jax.experimental import pallas as pl
from jax.experimental.pallas import tpu as pltpu

COEFF_DIM = 257  # id80+exp64+tex80+angle3+gamma27+trans3, same as FaceReconModel


# ----------------------------------------------------------------------------
# Kernel 1: align image  (clamp + truncate-toward-zero -> uint8)
#           lane-dense 2-D view, row-tiled grid
# ----------------------------------------------------------------------------
def _align_image_kernel(x_ref, o_ref):
    x = jnp.clip(x_ref[...], 0.0, 255.0)
    # torch: (im * 255).int() -> truncation toward zero; computed from the raw
    # [0,255] input directly so there is no (x/255)*255 round trip.
    o_ref[...] = x.astype(jnp.int32).astype(jnp.uint8)


def make_align_image(images_f32):
    """images_f32: (B, H, W, C) float32 in [0, 255] -> uint8 (B, H, W, C)."""
    B, H, W, C = images_f32.shape
    n = B * H * W * C
    # Prefer a wide (multiple-of-128) lane dimension so the uint8 stores are
    # unmasked; fall back to the (B*H, W*C) view if nothing divides.
    lanes = next((lw for lw in (2048, 1024, 512, 256, 128) if n % lw == 0),
                 W * C)
    rows = n // lanes
    row_tile = next((t for t in (1024, 512, 256, 128, 64, 32, 16, 8)
                     if rows % t == 0), rows)

    x2d = images_f32.reshape(rows, lanes)  # free reshape (contiguous)
    out = pl.pallas_call(
        _align_image_kernel,
        out_shape=jax.ShapeDtypeStruct((rows, lanes), jnp.uint8),
        grid=(rows // row_tile,),
        in_specs=[pl.BlockSpec((row_tile, lanes), lambda r: (r, 0))],
        out_specs=pl.BlockSpec((row_tile, lanes), lambda r: (r, 0)),
        compiler_params=pltpu.CompilerParams(
            dimension_semantics=("parallel",)),
    )(x2d)
    return out.reshape(B, H, W, C)


# ----------------------------------------------------------------------------
# Kernel 2: fused conv3x3(pad=1) + bias + ReLU + global-avg-pool + FC(257)
#           channel-major / lane-dense, single K=27 matmul, NB images per step
# ----------------------------------------------------------------------------
def _conv_gap_fc_kernel(x_ref, cw_ref, cb_ref, fw_ref, fb_ref, o_ref,
                        xz_ref, taps_ref, *, H, W, C, NB):
    HW = H * W
    PAD = W + 1                 # flat zero-pad run before/after each image
    FLAT = HW + 2 * PAD         # per-image segment length in the flat layout
    L = NB * FLAT               # lane extent of the tap buffer / conv output
    dt = xz_ref.dtype

    # ---- flat-padded, channel-major image scratch ---------------------------
    # Per-image segment layout: [PAD zeros | H*W pixels | PAD zeros]; the zero
    # runs provide the conv's top/bottom padding.  Only the pad lanes are
    # zeroed (interior fully overwritten each step) — no full-scratch memset.
    for i in range(NB):
        base = i * FLAT
        xz_ref[:, base:base + PAD] = jnp.zeros((C, PAD), dt)
        xz_ref[:, base + PAD:base + PAD + HW] = x_ref[i]
        xz_ref[:, base + PAD + HW:base + FLAT] = jnp.zeros((C, PAD), dt)
    xz_ref[:, L:] = jnp.zeros((C, 2 * W + 2), dt)   # tail guard (junk lanes)

    # ---- left/right edge masks, generated in-kernel (no HBM masks input) ----
    j = jax.lax.broadcasted_iota(jnp.int32, (1, L), 1)
    col = (j % FLAT) % W            # output-pixel column (junk lanes are never
    m_left = (col >= 1).astype(dt)  #  read back, so their mask value is moot)
    m_right = (col <= W - 2).astype(dt)

    # ---- im2col tap buffer: 9 shifted contiguous copies, masks fused --------
    for dy in range(3):
        for dx in range(3):
            k = dy * 3 + dx
            start = dy * W + dx
            tap = xz_ref[:, start:start + L]                 # (C, L)
            if dx == 0:
                tap = tap * m_left
            elif dx == 2:
                tap = tap * m_right
            taps_ref[k * C:(k + 1) * C, :] = tap

    # ---- single K=27 conv matmul + bias + ReLU (all NB images in one dot) ---
    acc = jnp.dot(cw_ref[...], taps_ref[...],
                  preferred_element_type=jnp.float32)        # (cmid, L) f32
    feat = jnp.maximum(acc + cb_ref[...], 0.0)

    # ---- per-image global average pool + batched FC head --------------------
    cols = [jnp.sum(feat[:, i * FLAT:i * FLAT + HW], axis=1, keepdims=True)
            for i in range(NB)]                              # valid lanes only
    pooled = jnp.concatenate(cols, axis=1).T * (1.0 / HW)    # (NB, cmid)
    out = jnp.dot(pooled, fw_ref[...], preferred_element_type=jnp.float32)
    o_ref[...] = out + fb_ref[...]                           # (NB, COEFF_DIM)


def conv_gap_fc(images_f32, conv_w, conv_b, fc_w, fc_b,
                *, max_pixels_per_step=1 << 18):
    """images_f32: (B, H, W, C) raw [0,255] floats -> (B, COEFF_DIM) coeffs.

    conv_w: (cmid, 27) with the 1/255 normalization folded in (bf16).
    """
    B, H, W, C = images_f32.shape
    HW = H * W
    cmid = conv_w.shape[0]
    coeff_dim = fc_w.shape[1]

    # Channel-major (matches torch's .permute(2,0,1) preprocess) + bf16 cast:
    # one fused XLA pass over the image; raw 0..255 values are exact in bf16.
    x = jnp.transpose(images_f32, (0, 3, 1, 2)).reshape(B, C, HW)
    x = x.astype(jnp.bfloat16)

    # Images per grid step: amortize per-step overhead at small H*W while
    # keeping the per-step VMEM working set bounded (v7x has only 64 MiB).
    nb = 1
    for cand in range(min(B, 8), 0, -1):
        if B % cand == 0 and cand * HW <= max_pixels_per_step:
            nb = cand
            break
    # TODO(synk): for very large H*W (>= 224x224) additionally tile the pixel
    # axis (GAP accumulator + 1-row halo) so the per-step working set never
    # approaches v7x's 64 MiB VMEM.

    PAD = W + 1
    FLAT = HW + 2 * PAD

    kernel = functools.partial(_conv_gap_fc_kernel, H=H, W=W, C=C, NB=nb)
    out = pl.pallas_call(
        kernel,
        out_shape=jax.ShapeDtypeStruct((B // nb, nb, coeff_dim), jnp.float32),
        grid=(B // nb,),
        in_specs=[
            pl.BlockSpec((nb, C, HW), lambda b: (b, 0, 0)),     # images (bf16)
            pl.BlockSpec((cmid, 27), lambda b: (0, 0)),         # conv w (bf16)
            pl.BlockSpec((cmid, 1), lambda b: (0, 0)),          # conv b
            pl.BlockSpec((cmid, coeff_dim), lambda b: (0, 0)),  # fc w
            pl.BlockSpec((1, coeff_dim), lambda b: (0, 0)),     # fc b
        ],
        out_specs=pl.BlockSpec((None, nb, coeff_dim), lambda b: (b, 0, 0)),
        scratch_shapes=[
            pltpu.VMEM((C, nb * FLAT + 2 * W + 2), jnp.bfloat16),  # padded img
            pltpu.VMEM((27, nb * FLAT), jnp.bfloat16),             # im2col taps
        ],
        compiler_params=pltpu.CompilerParams(
            dimension_semantics=("parallel",),
            vmem_limit_bytes=64 * 1024 * 1024),
    )(x, conv_w, conv_b, fc_w, fc_b)

    return out.reshape(B, coeff_dim)


# ----------------------------------------------------------------------------
# Reconstructor: deterministic synthetic parameters, forward == recon_coeff
# ----------------------------------------------------------------------------
class Reconstructor:
    def __init__(self, cin=3, cmid=32, coeff_dim=COEFF_DIM, seed=0):
        kcw, kcb, kfw, kfb = jax.random.split(jax.random.PRNGKey(seed), 4)
        # TODO(synk): the real FaceReconModel uses a ResNet-50 backbone; it is
        # replaced by a conv3x3+ReLU+GAP+FC regressor with identical I/O.
        conv_w = 0.05 * jax.random.normal(kcw, (cmid, 9 * cin), jnp.float32)
        # Fold the 1/255 image normalization into the conv weights so the
        # kernel consumes the raw [0,255] image; store bf16 for the MXU.
        self.conv_w = (conv_w * (1.0 / 255.0)).astype(jnp.bfloat16)
        self.conv_b = 0.01 * jax.random.normal(kcb, (cmid, 1), jnp.float32)
        self.fc_w = 0.05 * jax.random.normal(kfw, (cmid, coeff_dim), jnp.float32)
        self.fc_b = 0.01 * jax.random.normal(kfb, (1, coeff_dim), jnp.float32)

    def recon_coeff(self, batched_images, batched_lm5, return_image=True,
                    batch_mode=True):
        B, H, W, C = batched_images.shape
        imgs = batched_images.astype(jnp.float32)

        # landmark y-flip from preprocess_data: lm[:, -1] = H - 1 - lm[:, -1]
        lm = batched_lm5.reshape(B, -1, 2)
        lm = lm.at[:, :, -1].set(H - 1 - lm[:, :, -1])
        # TODO(synk): PIL/affine align_img (landmark-driven crop+resize to the
        # BFM template) has no clean Pallas equivalent; images used as-is.

        batch_coeff = conv_gap_fc(imgs, self.conv_w, self.conv_b,
                                  self.fc_w, self.fc_b)          # (B, 257)
        batch_align_img = make_align_image(imgs)                 # (B,H,W,3) u8
        return batch_coeff, batch_align_img

    def __call__(self, batched_images, batched_lm5, return_image=True):
        return self.recon_coeff(batched_images, batched_lm5, return_image)


if __name__ == "__main__":
    key = jax.random.PRNGKey(0)
    k_img, k_lm = jax.random.split(key)
    B, H, W, C = 2, 16, 16, 3
    # synthetic "uint8-range" images and 5-point landmarks
    images = jax.random.uniform(k_img, (B, H, W, C), jnp.float32, 0.0, 255.0)
    lm5 = jax.random.uniform(k_lm, (B, 5, 2), jnp.float32, 0.0, float(H - 1))

    recon = Reconstructor()
    batch_coeff, batch_align_img = recon(images, lm5)
    jax.block_until_ready(batch_coeff)
    jax.block_until_ready(batch_align_img)

    assert batch_coeff.shape == (B, COEFF_DIM) and batch_coeff.dtype == jnp.float32
    assert batch_align_img.shape == (B, H, W, C) and batch_align_img.dtype == jnp.uint8
    assert bool(jnp.all(jnp.isfinite(batch_coeff)))
    print("KERNEL_OK")
</pallas_src>

<mosaic_0001>
module attributes {stable_mosaic.version = 11 : i64} {
  func.func @_conv_gap_fc_kernel(%arg0: i32, %arg1: memref<2x3x256xbf16, #tpu.memory_space<vmem>>, %arg2: memref<32x27xbf16, #tpu.memory_space<vmem>>, %arg3: memref<32x1xf32, #tpu.memory_space<vmem>>, %arg4: memref<32x257xf32, #tpu.memory_space<vmem>>, %arg5: memref<1x257xf32, #tpu.memory_space<vmem>>, %arg6: memref<1x2x257xf32, #tpu.memory_space<vmem>>, %arg7: memref<3x614xbf16, #tpu.memory_space<vmem>>, %arg8: memref<27x580xbf16, #tpu.memory_space<vmem>>) attributes {dimension_semantics = [#tpu.dimension_semantics<parallel>], iteration_bounds = array<i64: 1>, scalar_prefetch = 0 : i64, scratch_operands = 2 : i64, tpu.core_type = #tpu.core_type<tc>, window_params = [{transform_indices = @transform_0, window_bounds = array<i64: 2, 3, 256>}, {pipeline_mode = #tpu.pipeline_mode<synchronous>, transform_indices = @transform_1, window_bounds = array<i64: 32, 27>}, {pipeline_mode = #tpu.pipeline_mode<synchronous>, transform_indices = @transform_2, window_bounds = array<i64: 32, 1>}, {pipeline_mode = #tpu.pipeline_mode<synchronous>, transform_indices = @transform_3, window_bounds = array<i64: 32, 257>}, {pipeline_mode = #tpu.pipeline_mode<synchronous>, transform_indices = @transform_4, window_bounds = array<i64: 1, 257>}, {transform_indices = @transform_5, window_bounds = array<i64: 1, 2, 257>}]} {
    %cst = arith.constant 0.000000e+00 : bf16
    %0 = vector.broadcast %cst : bf16 to vector<3x17xbf16>
    %c0 = arith.constant 0 : index
    %c0_0 = arith.constant 0 : index
    %1 = vector.load %arg7[%c0, %c0_0] : memref<3x614xbf16, #tpu.memory_space<vmem>>, vector<3x17xbf16>
    tpu.vector_store %arg7[%c0, %c0_0], %0 {strides = array<i32>} : memref<3x614xbf16, #tpu.memory_space<vmem>>, vector<3x17xbf16>,
    %c0_1 = arith.constant 0 : index
    %c0_2 = arith.constant 0 : index
    %c0_3 = arith.constant 0 : index
    %2 = vector.load %arg1[%c0_1, %c0_2, %c0_3] : memref<2x3x256xbf16, #tpu.memory_space<vmem>>, vector<1x3x256xbf16>
    %3 = vector.shape_cast %2 : vector<1x3x256xbf16> to vector<3x256xbf16>
    %c0_4 = arith.constant 0 : index
    %c17 = arith.constant 17 : index
    %4 = vector.load %arg7[%c0_4, %c17] : memref<3x614xbf16, #tpu.memory_space<vmem>>, vector<3x256xbf16>
    tpu.vector_store %arg7[%c0_4, %c17], %3 {strides = array<i32>} : memref<3x614xbf16, #tpu.memory_space<vmem>>, vector<3x256xbf16>,
    %cst_5 = arith.constant 0.000000e+00 : bf16
    %5 = vector.broadcast %cst_5 : bf16 to vector<3x17xbf16>
    %c0_6 = arith.constant 0 : index
    %c273 = arith.constant 273 : index
    %6 = vector.load %arg7[%c0_6, %c273] : memref<3x614xbf16, #tpu.memory_space<vmem>>, vector<3x17xbf16>
    tpu.vector_store %arg7[%c0_6, %c273], %5 {strides = array<i32>} : memref<3x614xbf16, #tpu.memory_space<vmem>>, vector<3x17xbf16>,
    %cst_7 = arith.constant 0.000000e+00 : bf16
    %7 = vector.broadcast %cst_7 : bf16 to vector<3x17xbf16>
    %c0_8 = arith.constant 0 : index
    %c290 = arith.constant 290 : index
    %8 = vector.load %arg7[%c0_8, %c290] : memref<3x614xbf16, #tpu.memory_space<vmem>>, vector<3x17xbf16>
    tpu.vector_store %arg7[%c0_8, %c290], %7 {strides = array<i32>} : memref<3x614xbf16, #tpu.memory_space<vmem>>, vector<3x17xbf16>,
    %c1 = arith.constant 1 : index
    %c0_9 = arith.constant 0 : index
    %c0_10 = arith.constant 0 : index
    %9 = vector.load %arg1[%c1, %c0_9, %c0_10] : memref<2x3x256xbf16, #tpu.memory_space<vmem>>, vector<1x3x256xbf16>
    %10 = vector.shape_cast %9 : vector<1x3x256xbf16> to vector<3x256xbf16>
    %c0_11 = arith.constant 0 : index
    %c307 = arith.constant 307 : index
    %11 = vector.load %arg7[%c0_11, %c307] : memref<3x614xbf16, #tpu.memory_space<vmem>>, vector<3x256xbf16>
    tpu.vector_store %arg7[%c0_11, %c307], %10 {strides = array<i32>} : memref<3x614xbf16, #tpu.memory_space<vmem>>, vector<3x256xbf16>,
    %cst_12 = arith.constant 0.000000e+00 : bf16
    %12 = vector.broadcast %cst_12 : bf16 to vector<3x17xbf16>
    %c0_13 = arith.constant 0 : index
    %c563 = arith.constant 563 : index
    %13 = vector.load %arg7[%c0_13, %c563] : memref<3x614xbf16, #tpu.memory_space<vmem>>, vector<3x17xbf16>
    tpu.vector_store %arg7[%c0_13, %c563], %12 {strides = array<i32>} : memref<3x614xbf16, #tpu.memory_space<vmem>>, vector<3x17xbf16>,
    %cst_14 = arith.constant 0.000000e+00 : bf16
    %14 = vector.broadcast %cst_14 : bf16 to vector<3x34xbf16>
    %c0_15 = arith.constant 0 : index
    %c580 = arith.constant 580 : index
    %15 = vector.load %arg7[%c0_15, %c580] : memref<3x614xbf16, #tpu.memory_space<vmem>>, vector<3x34xbf16>
    tpu.vector_store %arg7[%c0_15, %c580], %14 {strides = array<i32>} : memref<3x614xbf16, #tpu.memory_space<vmem>>, vector<3x34xbf16>,
    %16 = tpu.iota {dimensions = array<i32: 1>} : vector<1x580xi32>
    %c290_i32 = arith.constant 290 : i32
    %c0_i32 = arith.constant 0 : i32
    %17 = arith.cmpi eq, %c290_i32, %c0_i32 : i32
    %c1_i32 = arith.constant 1 : i32
    %18 = arith.select %17, %c1_i32, %c290_i32 : i32
    %19 = vector.broadcast %18 : i32 to vector<1x580xi32>
    %20 = arith.remsi %16, %19 : vector<1x580xi32>
    %c0_i32_16 = arith.constant 0 : i32
    %21 = vector.broadcast %c0_i32_16 : i32 to vector<1x580xi32>
    %22 = arith.cmpi ne, %20, %21 : vector<1x580xi32>
    %c0_i32_17 = arith.constant 0 : i32
    %23 = vector.broadcast %c0_i32_17 : i32 to vector<1x580xi32>
    %24 = arith.cmpi slt, %20, %23 : vector<1x580xi32>
    %c0_i32_18 = arith.constant 0 : i32
    %25 = arith.cmpi slt, %18, %c0_i32_18 : i32
    %26 = vector.broadcast %25 : i1 to vector<1x580xi1>
    %27 = vector.broadcast %26 : vector<1x580xi1> to vector<1x580xi1>
    %28 = arith.xori %24, %27 : vector<1x580xi1>
    %29 = arith.andi %28, %22 : vector<1x580xi1>
    %30 = vector.broadcast %18 : i32 to vector<1x580xi32>
    %31 = arith.addi %20, %30 : vector<1x580xi32>
    %32 = arith.select %29, %31, %20 : vector<1x580xi1>, vector<1x580xi32>
    %c16_i32 = arith.constant 16 : i32
    %c0_i32_19 = arith.constant 0 : i32
    %33 = arith.cmpi eq, %c16_i32, %c0_i32_19 : i32
    %c1_i32_20 = arith.constant 1 : i32
    %34 = arith.select %33, %c1_i32_20, %c16_i32 : i32
    %35 = vector.broadcast %34 : i32 to vector<1x580xi32>
    %36 = arith.remsi %32, %35 : vector<1x580xi32>
    %c0_i32_21 = arith.constant 0 : i32
    %37 = vector.broadcast %c0_i32_21 : i32 to vector<1x580xi32>
    %38 = arith.cmpi ne, %36, %37 : vector<1x580xi32>
    %c0_i32_22 = arith.constant 0 : i32
    %39 = vector.broadcast %c0_i32_22 : i32 to vector<1x580xi32>
    %40 = arith.cmpi slt, %36, %39 : vector<1x580xi32>
    %c0_i32_23 = arith.constant 0 : i32
    %41 = arith.cmpi slt, %34, %c0_i32_23 : i32
    %42 = vector.broadcast %41 : i1 to vector<1x580xi1>
    %43 = vector.broadcast %42 : vector<1x580xi1> to vector<1x580xi1>
    %44 = arith.xori %40, %43 : vector<1x580xi1>
    %45 = arith.andi %44, %38 : vector<1x580xi1>
    %46 = vector.broadcast %34 : i32 to vector<1x580xi32>
    %47 = arith.addi %36, %46 : vector<1x580xi32>
    %48 = arith.select %45, %47, %36 : vector<1x580xi1>, vector<1x580xi32>
    %c1_i32_24 = arith.constant 1 : i32
    %49 = vector.broadcast %c1_i32_24 : i32 to vector<1x580xi32>
    %50 = arith.cmpi sge, %48, %49 : vector<1x580xi32>
    %51 = arith.extui %50 : vector<1x580xi1> to vector<1x580xi32>
    %52 = arith.sitofp %51 : vector<1x580xi32> to vector<1x580xf32>
    %53 = arith.truncf %52 : vector<1x580xf32> to vector<1x580xbf16>
    %c14_i32 = arith.constant 14 : i32
    %54 = vector.broadcast %c14_i32 : i32 to vector<1x580xi32>
    %55 = arith.cmpi sle, %48, %54 : vector<1x580xi32>
    %56 = arith.extui %55 : vector<1x580xi1> to vector<1x580xi32>
    %57 = arith.sitofp %56 : vector<1x580xi32> to vector<1x580xf32>
    %58 = arith.truncf %57 : vector<1x580xf32> to vector<1x580xbf16>
    %c0_25 = arith.constant 0 : index
    %c0_26 = arith.constant 0 : index
    %59 = vector.load %arg7[%c0_25, %c0_26] : memref<3x614xbf16, #tpu.memory_space<vmem>>, vector<3x580xbf16>
    %60 = vector.broadcast %53 : vector<1x580xbf16> to vector<3x580xbf16>
    %61 = arith.mulf %59, %60 : vector<3x580xbf16>
    %c0_27 = arith.constant 0 : index
    %c0_28 = arith.constant 0 : index
    %62 = vector.load %arg8[%c0_27, %c0_28] : memref<27x580xbf16, #tpu.memory_space<vmem>>, vector<3x580xbf16>
    tpu.vector_store %arg8[%c0_27, %c0_28], %61 {strides = array<i32>} : memref<27x580xbf16, #tpu.memory_space<vmem>>, vector<3x580xbf16>,
    %c0_29 = arith.constant 0 : index
    %c1_30 = arith.constant 1 : index
    %63 = vector.load %arg7[%c0_29, %c1_30] : memref<3x614xbf16, #tpu.memory_space<vmem>>, vector<3x580xbf16>
    %c3 = arith.constant 3 : index
    %c0_31 = arith.constant 0 : index
    %64 = vector.load %arg8[%c3, %c0_31] : memref<27x580xbf16, #tpu.memory_space<vmem>>, vector<3x580xbf16>
    tpu.vector_store %arg8[%c3, %c0_31], %63 {strides = array<i32>} : memref<27x580xbf16, #tpu.memory_space<vmem>>, vector<3x580xbf16>,
    %c0_32 = arith.constant 0 : index
    %c2 = arith.constant 2 : index
    %65 = vector.load %arg7[%c0_32, %c2] : memref<3x614xbf16, #tpu.memory_space<vmem>>, vector<3x580xbf16>
    %66 = vector.broadcast %58 : vector<1x580xbf16> to vector<3x580xbf16>
    %67 = arith.mulf %65, %66 : vector<3x580xbf16>
    %c6 = arith.constant 6 : index
    %c0_33 = arith.constant 0 : index
    %68 = vector.load %arg8[%c6, %c0_33] : memref<27x580xbf16, #tpu.memory_space<vmem>>, vector<3x580xbf16>
    tpu.vector_store %arg8[%c6, %c0_33], %67 {strides = array<i32>} : memref<27x580xbf16, #tpu.memory_space<vmem>>, vector<3x580xbf16>,
    %c0_34 = arith.constant 0 : index
    %c16 = arith.constant 16 : index
    %69 = vector.load %arg7[%c0_34, %c16] : memref<3x614xbf16, #tpu.memory_space<vmem>>, vector<3x580xbf16>
    %70 = vector.broadcast %53 : vector<1x580xbf16> to vector<3x580xbf16>
    %71 = arith.mulf %69, %70 : vector<3x580xbf16>
    %c9 = arith.constant 9 : index
    %c0_35 = arith.constant 0 : index
    %72 = vector.load %arg8[%c9, %c0_35] : memref<27x580xbf16, #tpu.memory_space<vmem>>, vector<3x580xbf16>
    tpu.vector_store %arg8[%c9, %c0_35], %71 {strides = array<i32>} : memref<27x580xbf16, #tpu.memory_space<vmem>>, vector<3x580xbf16>,
    %c0_36 = arith.constant 0 : index
    %c17_37 = arith.constant 17 : index
    %73 = vector.load %arg7[%c0_36, %c17_37] : memref<3x614xbf16, #tpu.memory_space<vmem>>, vector<3x580xbf16>
    %c12 = arith.constant 12 : index
    %c0_38 = arith.constant 0 : index
    %74 = vector.load %arg8[%c12, %c0_38] : memref<27x580xbf16, #tpu.memory_space<vmem>>, vector<3x580xbf16>
    tpu.vector_store %arg8[%c12, %c0_38], %73 {strides = array<i32>} : memref<27x580xbf16, #tpu.memory_space<vmem>>, vector<3x580xbf16>,
    %c0_39 = arith.constant 0 : index
    %c18 = arith.constant 18 : index
    %75 = vector.load %arg7[%c0_39, %c18] : memref<3x614xbf16, #tpu.memory_space<vmem>>, vector<3x580xbf16>
    %76 = vector.broadcast %58 : vector<1x580xbf16> to vector<3x580xbf16>
    %77 = arith.mulf %75, %76 : vector<3x580xbf16>
    %c15 = arith.constant 15 : index
    %c0_40 = arith.constant 0 : index
    %78 = vector.load %arg8[%c15, %c0_40] : memref<27x580xbf16, #tpu.memory_space<vmem>>, vector<3x580xbf16>
    tpu.vector_store %arg8[%c15, %c0_40], %77 {strides = array<i32>} : memref<27x580xbf16, #tpu.memory_space<vmem>>, vector<3x580xbf16>,
    %c0_41 = arith.constant 0 : index
    %c32 = arith.constant 32 : index
    %79 = vector.load %arg7[%c0_41, %c32] : memref<3x614xbf16, #tpu.memory_space<vmem>>, vector<3x580xbf16>
    %80 = vector.broadcast %53 : vector<1x580xbf16> to vector<3x580xbf16>
    %81 = arith.mulf %79, %80 : vector<3x580xbf16>
    %c18_42 = arith.constant 18 : index
    %c0_43 = arith.constant 0 : index
    %82 = vector.load %arg8[%c18_42, %c0_43] : memref<27x580xbf16, #tpu.memory_space<vmem>>, vector<3x580xbf16>
    tpu.vector_store %arg8[%c18_42, %c0_43], %81 {strides = array<i32>} : memref<27x580xbf16, #tpu.memory_space<vmem>>, vector<3x580xbf16>,
    %c0_44 = arith.constant 0 : index
    %c33 = arith.constant 33 : index
    %83 = vector.load %arg7[%c0_44, %c33] : memref<3x614xbf16, #tpu.memory_space<vmem>>, vector<3x580xbf16>
    %c21 = arith.constant 21 : index
    %c0_45 = arith.constant 0 : index
    %84 = vector.load %arg8[%c21, %c0_45] : memref<27x580xbf16, #tpu.memory_space<vmem>>, vector<3x580xbf16>
    tpu.vector_store %arg8[%c21, %c0_45], %83 {strides = array<i32>} : memref<27x580xbf16, #tpu.memory_space<vmem>>, vector<3x580xbf16>,
    %c0_46 = arith.constant 0 : index
    %c34 = arith.constant 34 : index
    %85 = vector.load %arg7[%c0_46, %c34] : memref<3x614xbf16, #tpu.memory_space<vmem>>, vector<3x580xbf16>
    %86 = vector.broadcast %58 : vector<1x580xbf16> to vector<3x580xbf16>
    %87 = arith.mulf %85, %86 : vector<3x580xbf16>
    %c24 = arith.constant 24 : index
    %c0_47 = arith.constant 0 : index
    %88 = vector.load %arg8[%c24, %c0_47] : memref<27x580xbf16, #tpu.memory_space<vmem>>, vector<3x580xbf16>
    tpu.vector_store %arg8[%c24, %c0_47], %87 {strides = array<i32>} : memref<27x580xbf16, #tpu.memory_space<vmem>>, vector<3x580xbf16>,
    %c0_48 = arith.constant 0 : index
    %c0_49 = arith.constant 0 : index
    %89 = vector.load %arg2[%c0_48, %c0_49] : memref<32x27xbf16, #tpu.memory_space<vmem>>, vector<32x27xbf16>
    %c0_50 = arith.constant 0 : index
    %c0_51 = arith.constant 0 : index
    %90 = vector.load %arg8[%c0_50, %c0_51] : memref<27x580xbf16, #tpu.memory_space<vmem>>, vector<27x580xbf16>
    %cst_52 = arith.constant dense<0.000000e+00> : vector<32x580xf32>
    %91 = tpu.matmul %89, %90, %cst_52 {dimension_numbers = #tpu.dot_dimension_numbers<[1], [0], [0], [1], [0, 0, 1, 1], [], []>} : vector<32x27xbf16>, vector<27x580xbf16>, vector<32x580xf32> -> vector<32x580xf32>
    %c0_53 = arith.constant 0 : index
    %c0_54 = arith.constant 0 : index
    %92 = vector.load %arg3[%c0_53, %c0_54] : memref<32x1xf32, #tpu.memory_space<vmem>>, vector<32x1xf32>
    %93 = vector.broadcast %92 : vector<32x1xf32> to vector<32x580xf32>
    %94 = arith.addf %91, %93 : vector<32x580xf32>
    %cst_55 = arith.constant 0.000000e+00 : f32
    %95 = vector.broadcast %cst_55 : f32 to vector<32x580xf32>
    %96 = arith.maximumf %94, %95 : vector<32x580xf32>
    %97 = vector.extract_strided_slice %96 {offsets = [0, 0], sizes = [32, 256], strides = [1, 1]} : vector<32x580xf32> to vector<32x256xf32>
    %cst_56 = arith.constant dense<0.000000e+00> : vector<32xf32>
    %98 = vector.multi_reduction <add>, %97, %cst_56 [1] : vector<32x256xf32> to vector<32xf32>
    %99 = vector.shape_cast %98 : vector<32xf32> to vector<32x1xf32>
    %100 = vector.extract_strided_slice %96 {offsets = [0, 290], sizes = [32, 256], strides = [1, 1]} : vector<32x580xf32> to vector<32x256xf32>
    %cst_57 = arith.constant dense<0.000000e+00> : vector<32xf32>
    %101 = vector.multi_reduction <add>, %100, %cst_57 [1] : vector<32x256xf32> to vector<32xf32>
    %102 = vector.shape_cast %101 : vector<32xf32> to vector<32x1xf32>
    %103 = tpu.concatenate %99, %102 in 1 : vector<32x1xf32>, vector<32x1xf32> -> vector<32x2xf32>
    %104 = tpu.transpose %103, [1, 0] : vector<32x2xf32> -> vector<2x32xf32>
    %cst_58 = arith.constant 3.906250e-03 : f32
    %105 = vector.broadcast %cst_58 : f32 to vector<2x32xf32>
    %106 = arith.mulf %104, %105 : vector<2x32xf32>
    %c0_59 = arith.constant 0 : index
    %c0_60 = arith.constant 0 : index
    %107 = vector.load %arg4[%c0_59, %c0_60] : memref<32x257xf32, #tpu.memory_space<vmem>>, vector<32x257xf32>
    %cst_61 = arith.constant dense<0.000000e+00> : vector<2x257xf32>
    %108 = tpu.matmul %106, %107, %cst_61 {dimension_numbers = #tpu.dot_dimension_numbers<[1], [0], [0], [1], [0, 0, 1, 1], [], []>} : vector<2x32xf32>, vector<32x257xf32>, vector<2x257xf32> -> vector<2x257xf32>
    %c0_62 = arith.constant 0 : index
    %c0_63 = arith.constant 0 : index
    %109 = vector.load %arg5[%c0_62, %c0_63] : memref<1x257xf32, #tpu.memory_space<vmem>>, vector<1x257xf32>
    %110 = vector.broadcast %109 : vector<1x257xf32> to vector<2x257xf32>
    %111 = arith.addf %108, %110 : vector<2x257xf32>
    %c0_64 = arith.constant 0 : index
    %c0_65 = arith.constant 0 : index
    %c0_66 = arith.constant 0 : index
    %112 = vector.load %arg6[%c0_64, %c0_65, %c0_66] : memref<1x2x257xf32, #tpu.memory_space<vmem>>, vector<1x2x257xf32>
    %113 = vector.shape_cast %112 : vector<1x2x257xf32> to vector<2x257xf32>
    %114 = vector.shape_cast %111 : vector<2x257xf32> to vector<1x2x257xf32>
    tpu.vector_store %arg6[%c0_64, %c0_65, %c0_66], %114 {strides = array<i32>} : memref<1x2x257xf32, #tpu.memory_space<vmem>>, vector<1x2x257xf32>,
    return
  }
  func.func @transform_0(%arg0: i32) -> (i32, i32, i32) {
    %c0_i32 = arith.constant 0 : i32
    %c0_i32_0 = arith.constant 0 : i32
    %c0_i32_1 = arith.constant 0 : i32
    return %arg0, %c0_i32, %c0_i32_0 : i32, i32, i32
  }
  func.func @transform_1(%arg0: i32) -> (i32, i32) {
    %c0_i32 = arith.constant 0 : i32
    %c0_i32_0 = arith.constant 0 : i32
    %c0_i32_1 = arith.constant 0 : i32
    return %c0_i32, %c0_i32_0 : i32, i32
  }
  func.func @transform_2(%arg0: i32) -> (i32, i32) {
    %c0_i32 = arith.constant 0 : i32
    %c0_i32_0 = arith.constant 0 : i32
    %c0_i32_1 = arith.constant 0 : i32
    return %c0_i32, %c0_i32_0 : i32, i32
  }
  func.func @transform_3(%arg0: i32) -> (i32, i32) {
    %c0_i32 = arith.constant 0 : i32
    %c0_i32_0 = arith.constant 0 : i32
    %c0_i32_1 = arith.constant 0 : i32
    return %c0_i32, %c0_i32_0 : i32, i32
  }
  func.func @transform_4(%arg0: i32) -> (i32, i32) {
    %c0_i32 = arith.constant 0 : i32
    %c0_i32_0 = arith.constant 0 : i32
    %c0_i32_1 = arith.constant 0 : i32
    return %c0_i32, %c0_i32_0 : i32, i32
  }
  func.func @transform_5(%arg0: i32) -> (i32, i32, i32) {
    %c0_i32 = arith.constant 0 : i32
    %c0_i32_0 = arith.constant 0 : i32
    %c0_i32_1 = arith.constant 0 : i32
    return %arg0, %c0_i32, %c0_i32_0 : i32, i32, i32
  }
}

</mosaic_0001>

<llo_original>
// kernel: tpu_custom_call.1
$region0: #{tpu_custom_call.1}
  #allocation0 [shape = 'u32[]', space=smem, size = 0x4, offset = 0x4, fixed_abs, tag = 'smem constant byte address 0x4 - core index']
  #allocation1 [shape = 'u32[144,128]{1,0:T(1,128)}', space=vmem, size = 0x12000, scoped, tag = 'internal scratch']
  #allocation2 [shape = 'bf16[3,614]{1,0:T(4,128)(2,1)}', space=vmem, size = 0x1400, scoped, tag = 'scratch operand']
  #allocation3 [shape = 'bf16[27,580]{1,0:T(8,128)(2,1)}', space=vmem, size = 0xa000, scoped, tag = 'scratch operand']
  %s0 = inlined_call_operand.hbm [shape: bf16[2,3,256], index: 0, kind: input, shape index: {}]
  %s1 = inlined_call_operand.hbm [shape: bf16[32,27], index: 1, kind: input, shape index: {}]
  %s2 = inlined_call_operand.hbm [shape: f32[32,1], index: 2, kind: input, shape index: {}]
  %s3 = inlined_call_operand.hbm [shape: f32[32,257], index: 3, kind: input, shape index: {}]
  %s4 = inlined_call_operand.hbm [shape: f32[1,257], index: 4, kind: input, shape index: {}]
  %s5 = inlined_call_operand.hbm [shape: f32[1,2,257], index: 5, kind: output, shape index: {}]
  %s6 = sld [smem:[#allocation0]]
  $region50: #{tpu_custom_call.1} parent=0
    _
  %s8 = ssub.s32 1, %s6
  %s9 = scalar_select 0, %s8, %s6
  $region1: #{tpu_custom_call.1} parent=0
    #allocation4 [shape = 'u8[4096]{0}', space=vmem, size = 0x1000, scoped, tag = 'input window, operand 0, single buffered']
    #allocation5 [shape = 's32[1]{0}', space=sflag, size = 0x4, scoped, tag = 'scoped memory for tpu_custom_call.1']
    #allocation6 [shape = 's32[1]{0}', space=sflag, size = 0x4, scoped, tag = 'scoped memory for tpu_custom_call.1']
    #allocation7 [shape = 'u8[8192]{0}', space=vmem, size = 0x2000, scoped, tag = 'input window, operand 1, single buffered']
    #allocation8 [shape = 's32[1]{0}', space=sflag, size = 0x4, scoped, tag = 'scoped memory for tpu_custom_call.1']
    #allocation9 [shape = 'u8[16384]{0}', space=vmem, size = 0x4000, scoped, tag = 'input window, operand 2, single buffered']
    #allocation10 [shape = 'u8[49152]{0}', space=vmem, size = 0xc000, scoped, tag = 'input window, operand 3, single buffered']
    #allocation11 [shape = 's32[1]{0}', space=sflag, size = 0x4, scoped, tag = 'scoped memory for tpu_custom_call.1']
    #allocation12 [shape = 'u8[1536]{0}', space=vmem, size = 0x800, scoped, tag = 'input window, operand 4, single buffered']
    #allocation13 [shape = 'u8[3072]{0}', space=vmem, size = 0xc00, scoped, tag = 'output window, operand 0, single buffered']
    %10 = vsyncpa [#allocation5], 0
    %11 = vsyncpa [#allocation8], 0
    %12 = vsyncpa [#allocation11], 0
    %13 = vsyncpa [#allocation6], 0
    // Predicated region
    $region2: #{tpu_custom_call.1} parent=1 // pred_check
      _
    $region3: #{tpu_custom_call.1} parent=1 // pred_check_branch
      %15 = sbr.rel (0) target = $region5
    $region4: #{tpu_custom_call.1} parent=1 // pred_region
      %s17 = ssub.s32 128, 128
      %18 = vsyncadd [#allocation5], %s17
      %s19 = sshll.u32 [#allocation4], 4
      %s20 = int_to_ptr.vmem [resolvable:$true] %s19
      %25 = dma.hbm_to_vmem [thread:$0]  %s0, 128, %s20, [#allocation5], 64, 64, 4
    $region5: #{tpu_custom_call.1} parent=1 // pred_fallthru
      _
    // Predicated region
    $region6: #{tpu_custom_call.1} parent=1 // pred_check
      _
    $region7: #{tpu_custom_call.1} parent=1 // pred_check_branch
      %27 = sbr.rel (0) target = $region9
    $region8: #{tpu_custom_call.1} parent=1 // pred_region
      %s29 = ssub.s32 256, 256
      %30 = vsyncadd [#allocation8], %s29
      %s31 = sshll.u32 [#allocation7], 4
      %s32 = int_to_ptr.vmem [resolvable:$true] %s31
      %37 = dma.hbm_to_vmem [thread:$0]  %s1, 256, %s32, [#allocation8], 64, 64, 4
    $region9: #{tpu_custom_call.1} parent=1 // pred_fallthru
      _
    // Predicated region
    $region10: #{tpu_custom_call.1} parent=1 // pred_check
      _
    $region11: #{tpu_custom_call.1} parent=1 // pred_check_branch
      %39 = sbr.rel (0) target = $region13
    $region12: #{tpu_custom_call.1} parent=1 // pred_region
      %s41 = ssub.s32 512, 512
      %42 = vsyncadd [#allocation8], %s41
      %s43 = sshll.u32 [#allocation9], 4
      %s44 = int_to_ptr.vmem [resolvable:$true] %s43
      %49 = dma.hbm_to_vmem [thread:$0]  %s2, 512, %s44, [#allocation8], 128, 128, 8
    $region13: #{tpu_custom_call.1} parent=1 // pred_fallthru
      _
    // Predicated region
    $region14: #{tpu_custom_call.1} parent=1 // pred_check
      _
    $region15: #{tpu_custom_call.1} parent=1 // pred_check_branch
      %51 = sbr.rel (0) target = $region17
    $region16: #{tpu_custom_call.1} parent=1 // pred_region
      %s53 = ssub.s32 1536, 1536
      %54 = vsyncadd [#allocation11], %s53
      %s55 = sshll.u32 [#allocation10], 4
      %s56 = int_to_ptr.vmem [resolvable:$true] %s55
      %61 = dma.hbm_to_vmem [thread:$0]  %s3, 1536, %s56, [#allocation11], 384, 384, 24
    $region17: #{tpu_custom_call.1} parent=1 // pred_fallthru
      _
    // Predicated region
    $region18: #{tpu_custom_call.1} parent=1 // pred_check
      _
    $region19: #{tpu_custom_call.1} parent=1 // pred_check_branch
      %63 = sbr.rel (0) target = $region21
    $region20: #{tpu_custom_call.1} parent=1 // pred_region
      %s65 = ssub.s32 48, 48
      %66 = vsyncadd [#allocation11], %s65
      %s68 = sshll.u32 [#allocation12], 4
      %s69 = int_to_ptr.vmem [resolvable:$true] %s68
      %71 = dma.hbm_to_vmem [thread:$0]  %s4, 48, %s69, [#allocation11]
    $region21: #{tpu_custom_call.1} parent=1 // pred_fallthru
      _
    // Predicated region
    $region22: #{tpu_custom_call.1} parent=1 // pred_check
      _
    $region23: #{tpu_custom_call.1} parent=1 // pred_check_branch
      %73 = sbr.rel (0) target = $region25
    $region24: #{tpu_custom_call.1} parent=1 // pred_region
      %74 = dma.done [#allocation5], 128
    $region25: #{tpu_custom_call.1} parent=1 // pred_fallthru
      _
    // Predicated region
    $region26: #{tpu_custom_call.1} parent=1 // pred_check
      _
    $region27: #{tpu_custom_call.1} parent=1 // pred_check_branch
      %76 = sbr.rel (0) target = $region29
    $region28: #{tpu_custom_call.1} parent=1 // pred_region
      %77 = dma.done [#allocation8], 256
    $region29: #{tpu_custom_call.1} parent=1 // pred_fallthru
      _
    // Predicated region
    $region30: #{tpu_custom_call.1} parent=1 // pred_check
      _
    $region31: #{tpu_custom_call.1} parent=1 // pred_check_branch
      %79 = sbr.rel (0) target = $region33
    $region32: #{tpu_custom_call.1} parent=1 // pred_region
      %80 = dma.done [#allocation8], 512
    $region33: #{tpu_custom_call.1} parent=1 // pred_fallthru
      _
    // Predicated region
    $region34: #{tpu_custom_call.1} parent=1 // pred_check
      _
    $region35: #{tpu_custom_call.1} parent=1 // pred_check_branch
      %82 = sbr.rel (0) target = $region37
    $region36: #{tpu_custom_call.1} parent=1 // pred_region
      %83 = dma.done [#allocation11], 1536
    $region37: #{tpu_custom_call.1} parent=1 // pred_fallthru
      _
    // Predicated region
    $region38: #{tpu_custom_call.1} parent=1 // pred_check
      _
    $region39: #{tpu_custom_call.1} parent=1 // pred_check_branch
      %85 = sbr.rel (0) target = $region41
    $region40: #{tpu_custom_call.1} parent=1 // pred_region
      %86 = dma.done [#allocation11], 48
    $region41: #{tpu_custom_call.1} parent=1 // pred_fallthru
      _
    %vm88 = vcmask 132096
    %vm89 = vsmask.f32 1280
    %vm90 = vmand %vm88, %vm89
    %v91 = vld [vmem:[#allocation2] sm:$0x3]
    %v92 = vsel %vm90, 0, %v91
    %93 = vst [vmem:[#allocation2] sm:$0x3] %v92
    %v94 = vld [vmem:[#allocation4] sm:$0xf]
    %96 = vrot.lane.b32.xlu0 %v94, 17
    %v97 = vpop.permute.xlu0 %96
    %v98 = vrot.slane %v97, 6
    %vm99 = vcmask 138240
    %v100 = vsel %vm99, %v98, %v97
    %vm102 = vcmask 1041544
    %vm103 = vmand %vm102, %vm89
    %vm104 = vcmask 1043458
    %vm105 = vsmask.f32 3328
    %vm106 = vmand %vm104, %vm105
    %vm107 = vmor %vm106, %vm103
    %vm108 = vcmask 136196
    %vm109 = vsmask.f32 5376
    %vm110 = vmand %vm108, %vm109
    %vm111 = vmor %vm110, %vm107
    %v112 = vld [vmem:[#allocation2] sm:$0x3f]
    %v113 = vsel %vm111, %v100, %v112
    %114 = vst [vmem:[#allocation2] sm:$0x3f] %v113
    %vm115 = vcmask 271496
    %vm116 = vmand %vm115, %vm89
    %v117 = vld [vmem:[#allocation2 + $0x4] sm:$0x3]
    %v118 = vsel %vm116, 0, %v117
    %119 = vst [vmem:[#allocation2 + $0x4] sm:$0x3] %v118
    %vm120 = vcmask 410896
    %vm121 = vmand %vm120, %vm89
    %v122 = vld [vmem:[#allocation2 + $0x4] sm:$0x3]
    %v123 = vsel %vm121, 0, %v122
    %124 = vst [vmem:[#allocation2 + $0x4] sm:$0x3] %v123
    %s125 = scalar_lea.vmem [#allocation4], 4
    %v126 = vld [vmem:[%s125] sm:$0xf]
    %128 = vrot.lane.b32.xlu0 %v126, 51
    %v129 = vpop.permute.xlu0 %128
    %v130 = vrot.slane %v129, 6
    %vm131 = vcmask 416768
    %v132 = vsel %vm131, %v130, %v129
    %vm134 = vcmask 1041816
    %vm135 = vmand %vm134, %vm89
    %vm136 = vmor %vm106, %vm135
    %vm137 = vcmask 414724
    %vm138 = vmand %vm137, %vm109
    %vm139 = vmor %vm138, %vm136
    %v140 = vld [vmem:[#allocation2 + $0x4] sm:$0x3f]
    %v141 = vsel %vm139, %v132, %v140
    %142 = vst [vmem:[#allocation2 + $0x4] sm:$0x3f] %v141
    %vm143 = vcmask 550296
    %vm144 = vmand %vm143, %vm89
    %v145 = vld [vmem:[#allocation2 + $0x8] sm:$0x3]
    %v146 = vsel %vm144, 0, %v145
    %147 = vst [vmem:[#allocation2 + $0x8] sm:$0x3] %v146
    %vm148 = vcmask 828960
    %vm149 = vmand %vm148, %vm89
    %v150 = vld [vmem:[#allocation2 + $0x8] sm:$0x3]
    %v151 = vsel %vm149, 0, %v150
    %152 = vst [vmem:[#allocation2 + $0x8] sm:$0x3] %v151
    %v153 = vlaneseq
    %v154 = vand.u32 %v153, 127
    %v155 = vadd.s32 %v154, 128
    %v156 = vadd.s32 %v154, 256
    %v157 = vadd.s32 %v154, 384
    %v158 = vadd.s32 %v154, 512
    %vm159 = vcmp.lt.s32.totalorder %v154, 0
    %v160 = vsub.s32 0, %v154
    %v161 = vsel %vm159, %v160, %v154
    %v162 = vmul.u32.u64.compose %v161, 3791419407
    %v163 = vextract.low.u32 %v162
    %v164 = vextract.high.u32 %v162
    %v165 = vshrl.u32 %v164, 8
    %v166 = vmul.u32 %v165, 290
    %v167 = vsub.s32 %v161, %v166
    %v168 = vsub.s32 0, %v167
    %v169 = vsel %vm159, %v168, %v167
    %vm170 = vcmp.lt.s32.totalorder %v155, 0
    %v171 = vsub.s32 0, %v155
    %v172 = vsel %vm170, %v171, %v155
    %v173 = vmul.u32.u64.compose %v172, 3791419407
    %v174 = vextract.low.u32 %v173
    %v175 = vextract.high.u32 %v173
    %v176 = vshrl.u32 %v175, 8
    %v177 = vmul.u32 %v176, 290
    %v178 = vsub.s32 %v172, %v177
    %v179 = vsub.s32 0, %v178
    %v180 = vsel %vm170, %v179, %v178
    %vm181 = vcmp.lt.s32.totalorder %v156, 0
    %v182 = vsub.s32 0, %v156
    %v183 = vsel %vm181, %v182, %v156
    %v184 = vmul.u32.u64.compose %v183, 3791419407
    %v185 = vextract.low.u32 %v184
    %v186 = vextract.high.u32 %v184
    %v187 = vshrl.u32 %v186, 8
    %v188 = vmul.u32 %v187, 290
    %v189 = vsub.s32 %v183, %v188
    %v190 = vsub.s32 0, %v189
    %v191 = vsel %vm181, %v190, %v189
    %vm192 = vcmp.lt.s32.totalorder %v157, 0
    %v193 = vsub.s32 0, %v157
    %v194 = vsel %vm192, %v193, %v157
    %v195 = vmul.u32.u64.compose %v194, 3791419407
    %v196 = vextract.low.u32 %v195
    %v197 = vextract.high.u32 %v195
    %v198 = vshrl.u32 %v197, 8
    %v199 = vmul.u32 %v198, 290
    %v200 = vsub.s32 %v194, %v199
    %v201 = vsub.s32 0, %v200
    %v202 = vsel %vm192, %v201, %v200
    %vm203 = vcmp.lt.s32.totalorder %v158, 0
    %v204 = vsub.s32 0, %v158
    %v205 = vsel %vm203, %v204, %v158
    %v206 = vmul.u32.u64.compose %v205, 3791419407
    %v207 = vextract.low.u32 %v206
    %v208 = vextract.high.u32 %v206
    %v209 = vshrl.u32 %v208, 8
    %v210 = vmul.u32 %v209, 290
    %v211 = vsub.s32 %v205, %v210
    %v212 = vsub.s32 0, %v211
    %v213 = vsel %vm203, %v212, %v211
    %vm214 = vcmp.ne.s32.totalorder %v169, 0
    %vm215 = vcmp.ne.s32.totalorder %v180, 0
    %vm216 = vcmp.ne.s32.totalorder %v191, 0
    %vm217 = vcmp.ne.s32.totalorder %v202, 0
    %vm218 = vcmp.ne.s32.totalorder %v213, 0
    %vm219 = vcmp.lt.s32.totalorder %v169, 0
    %vm220 = vcmp.lt.s32.totalorder %v180, 0
    %vm221 = vcmp.lt.s32.totalorder %v191, 0
    %vm222 = vcmp.lt.s32.totalorder %v202, 0
    %vm223 = vcmp.lt.s32.totalorder %v213, 0
    %vm224 = vmand %vm219, %vm214
    %vm225 = vmand %vm220, %vm215
    %vm226 = vmand %vm221, %vm216
    %vm227 = vmand %vm222, %vm217
    %vm228 = vmand %vm223, %vm218
    %v229 = vadd.s32 %v169, 290
    %v230 = vadd.s32 %v180, 290
    %v231 = vadd.s32 %v191, 290
    %v232 = vadd.s32 %v202, 290
    %v233 = vadd.s32 %v213, 290
    %v234 = vsel %vm224, %v229, %v169
    %v235 = vsel %vm225, %v230, %v180
    %v236 = vsel %vm226, %v231, %v191
    %v237 = vsel %vm227, %v232, %v202
    %v238 = vsel %vm228, %v233, %v213
    %vm239 = vcmp.lt.s32.totalorder %v234, 0
    %v240 = vsub.s32 0, %v234
    %v241 = vsel %vm239, %v240, %v234
    %v242 = vshrl.u32 %v241, 4
    %v243 = vand.u32 %v241, 15
    %v244 = vsub.s32 0, %v243
    %v245 = vsel %vm239, %v244, %v243
    %vm246 = vcmp.lt.s32.totalorder %v235, 0
    %v247 = vsub.s32 0, %v235
    %v248 = vsel %vm246, %v247, %v235
    %v249 = vshrl.u32 %v248, 4
    %v250 = vand.u32 %v248, 15
    %v251 = vsub.s32 0, %v250
    %v252 = vsel %vm246, %v251, %v250
    %vm253 = vcmp.lt.s32.totalorder %v236, 0
    %v254 = vsub.s32 0, %v236
    %v255 = vsel %vm253, %v254, %v236
    %v256 = vshrl.u32 %v255, 4
    %v257 = vand.u32 %v255, 15
    %v258 = vsub.s32 0, %v257
    %v259 = vsel %vm253, %v258, %v257
    %vm260 = vcmp.lt.s32.totalorder %v237, 0
    %v261 = vsub.s32 0, %v237
    %v262 = vsel %vm260, %v261, %v237
    %v263 = vshrl.u32 %v262, 4
    %v264 = vand.u32 %v262, 15
    %v265 = vsub.s32 0, %v264
    %v266 = vsel %vm260, %v265, %v264
    %vm267 = vcmp.lt.s32.totalorder %v238, 0
    %v268 = vsub.s32 0, %v238
    %v269 = vsel %vm267, %v268, %v238
    %v270 = vshrl.u32 %v269, 4
    %v271 = vand.u32 %v269, 15
    %v272 = vsub.s32 0, %v271
    %v273 = vsel %vm267, %v272, %v271
    %vm274 = vcmp.ne.s32.totalorder %v245, 0
    %vm275 = vcmp.ne.s32.totalorder %v252, 0
    %vm276 = vcmp.ne.s32.totalorder %v259, 0
    %vm277 = vcmp.ne.s32.totalorder %v266, 0
    %vm278 = vcmp.ne.s32.totalorder %v273, 0
    %vm279 = vcmp.lt.s32.totalorder %v245, 0
    %vm280 = vcmp.lt.s32.totalorder %v252, 0
    %vm281 = vcmp.lt.s32.totalorder %v259, 0
    %vm282 = vcmp.lt.s32.totalorder %v266, 0
    %vm283 = vcmp.lt.s32.totalorder %v273, 0
    %vm284 = vmand %vm279, %vm274
    %vm285 = vmand %vm280, %vm275
    %vm286 = vmand %vm281, %vm276
    %vm287 = vmand %vm282, %vm277
    %vm288 = vmand %vm283, %vm278
    %v289 = vadd.s32 %v245, 16
    %v290 = vadd.s32 %v252, 16
    %v291 = vadd.s32 %v259, 16
    %v292 = vadd.s32 %v266, 16
    %v293 = vadd.s32 %v273, 16
    %v294 = vsel %vm284, %v289, %v245
    %v295 = vsel %vm285, %v290, %v252
    %v296 = vsel %vm286, %v291, %v259
    %v297 = vsel %vm287, %v292, %v266
    %v298 = vsel %vm288, %v293, %v273
    %vm299 = vcmp.ge.s32.totalorder %v294, 1
    %vm300 = vcmp.ge.s32.totalorder %v295, 1
    %vm301 = vcmp.ge.s32.totalorder %v296, 1
    %vm302 = vcmp.ge.s32.totalorder %v297, 1
    %vm303 = vcmp.ge.s32.totalorder %v298, 1
    %v304 = vsel %vm299, 1, 0
    %v305 = vsel %vm300, 1, 0
    %v306 = vsel %vm301, 1, 0
    %v307 = vsel %vm302, 1, 0
    %v308 = vsel %vm303, 1, 0
    %v309 = vcvt.s32.f32 %v304
    %v310 = vcvt.s32.f32 %v305
    %v311 = vcvt.s32.f32 %v306
    %v312 = vcvt.s32.f32 %v307
    %v313 = vcvt.s32.f32 %v308
    %v314 = vpack.c.bf16 %v309, %v309
    %v315 = vpack.c.bf16 %v310, %v310
    %v316 = vpack.c.bf16 %v311, %v311
    %v317 = vpack.c.bf16 %v312, %v312
    %v318 = vpack.c.bf16 %v313, %v313
    %vm319 = vcmp.le.s32.totalorder %v294, 14
    %vm320 = vcmp.le.s32.totalorder %v295, 14
    %vm321 = vcmp.le.s32.totalorder %v296, 14
    %vm322 = vcmp.le.s32.totalorder %v297, 14
    %vm323 = vcmp.le.s32.totalorder %v298, 14
    %v324 = vsel %vm319, 1, 0
    %v325 = vsel %vm320, 1, 0
    %v326 = vsel %vm321, 1, 0
    %v327 = vsel %vm322, 1, 0
    %v328 = vsel %vm323, 1, 0
    %v329 = vcvt.s32.f32 %v324
    %v330 = vcvt.s32.f32 %v325
    %v331 = vcvt.s32.f32 %v326
    %v332 = vcvt.s32.f32 %v327
    %v333 = vcvt.s32.f32 %v328
    %v334 = vpack.c.bf16 %v329, %v329
    %v335 = vpack.c.bf16 %v330, %v330
    %v336 = vpack.c.bf16 %v331, %v331
    %v337 = vpack.c.bf16 %v332, %v332
    %v338 = vpack.c.bf16 %v333, %v333
    %v339 = vld [vmem:[#allocation2] sm:$0xff]
    %v340 = vld [vmem:[#allocation2 + $0x8] sm:$0x3]
    %v346 = vcombine.low %v314, %v315
    %v347 = vcombine.low %v316, %v317
    %v349 = vunpack.c.l.s4 1983009808
    %v350 = vunpack.c.0.s8 %v349
    %v351 = vlaneseq
    %v352 = vshrl.u32 %v351, 7
    %v353 = vsub.s32 %v350, %v352
    %v354 = vrot.slane %v346, %v353
    %v356 = vunpack.c.l.s4 1983009808
    %v357 = vunpack.c.0.s8 %v356
    %v358 = vlaneseq
    %v359 = vshrl.u32 %v358, 7
    %v360 = vsub.s32 %v357, %v359
    %v361 = vrot.slane %v347, %v360
    %v362 = vcombine.low %v354, %v361
    %v364 = vunpack.c.l.s4 1983009808
    %v365 = vunpack.c.0.s8 %v364
    %v366 = vlaneseq
    %v367 = vshrl.u32 %v366, 7
    %v368 = vsub.s32 %v365, %v367
    %v369 = vrot.slane %v318, %v368
    %v372 = vmul.bf16 %v339, %v362
    %v373 = vmul.bf16 %v340, %v369
    %v376 = vcombine.high %v372, %v372
    %v378 = vunpack.c.l.s4 1983009808
    %v379 = vunpack.c.0.s8 %v378
    %v380 = vlaneseq
    %v381 = vshrl.u32 %v380, 7
    %v382 = vsub.s32 %v379, %v381
    %v383 = vrot.slane %v372, %v382
    %v385 = vunpack.c.l.s4 1983009808
    %v386 = vunpack.c.0.s8 %v385
    %v387 = vlaneseq
    %v388 = vshrl.u32 %v387, 7
    %v389 = vsub.s32 %v386, %v388
    %v390 = vrot.slane %v376, %v389
    %v392 = vunpack.c.l.s4 1983009808
    %v393 = vunpack.c.0.s8 %v392
    %v394 = vlaneseq
    %v395 = vshrl.u32 %v394, 7
    %v396 = vsub.s32 %v393, %v395
    %v397 = vrot.slane %v373, %v396
    %vm401 = vcmask 1041408
    %vm402 = vmand %vm401, %vm89
    %vm403 = vcmask 1045508
    %vm404 = vmand %vm403, %vm109
    %vm405 = vmor %vm404, %vm402
    %v406 = vld [vmem:[#allocation3] sm:$0x33]
    %v407 = vsel %vm405, %v383, %v406
    %408 = vst [vmem:[#allocation3] sm:$0x33] %v407
    %v409 = vld [vmem:[#allocation3 + $0x8] sm:$0x33]
    %v410 = vsel %vm405, %v390, %v409
    %411 = vst [vmem:[#allocation3 + $0x8] sm:$0x33] %v410
    %vm412 = vcmask 549888
    %vm413 = vmand %vm412, %vm89
    %v414 = vld [vmem:[#allocation3 + $0x10] sm:$0x3]
    %v415 = vsel %vm413, %v397, %v414
    %416 = vst [vmem:[#allocation3 + $0x10] sm:$0x3] %v415
    %v417 = vld [vmem:[#allocation2] sm:$0xff]
    %v418 = vld [vmem:[#allocation2 + $0x8] sm:$0x3]
    %v421 = vcombine.high %v417, %v417
    %v423 = vunpack.c.l.s4 1983009808
    %v424 = vunpack.c.0.s8 %v423
    %v425 = vlaneseq
    %v426 = vshrl.u32 %v425, 7
    %v427 = vsub.s32 %v424, %v426
    %v428 = vrot.slane %v417, %v427
    %v430 = vunpack.c.l.s4 1983009808
    %v431 = vunpack.c.0.s8 %v430
    %v432 = vlaneseq
    %v433 = vshrl.u32 %v432, 7
    %v434 = vsub.s32 %v431, %v433
    %v435 = vrot.slane %v421, %v434
    %v437 = vunpack.c.l.s4 1983009808
    %v438 = vunpack.c.0.s8 %v437
    %v439 = vlaneseq
    %v440 = vshrl.u32 %v439, 7
    %v441 = vsub.s32 %v438, %v440
    %v442 = vrot.slane %v418, %v441
    %v444 = vshrl.u32 %v428, 16
    %v446 = vrot.slane %v444, 6
    %v447 = vshll.u32 %v428, 16
    %v449 = vrot.slane %v447, 7
    %v450 = vor.u32 %v446, %v449
    %v452 = vshrl.u32 %v435, 16
    %v454 = vrot.slane %v452, 6
    %v455 = vshll.u32 %v435, 16
    %v457 = vrot.slane %v455, 7
    %v458 = vor.u32 %v454, %v457
    %v460 = vshrl.u32 %v442, 16
    %v462 = vrot.slane %v460, 6
    %v463 = vshll.u32 %v442, 16
    %v465 = vrot.slane %v463, 7
    %v466 = vor.u32 %v462, %v465
    %467 = vrot.lane.b32.xlu0 %v450, 127
    %v468 = vpop.permute.xlu0 %467
    %469 = vrot.lane.b32.xlu0 %v458, 127
    %v470 = vpop.permute.xlu0 %469
    %471 = vrot.lane.b32.xlu0 %v466, 127
    %v472 = vpop.permute.xlu0 %471
    %v473 = vrot.slane %v468, 4
    %v474 = vrot.slane %v470, 4
    %v475 = vrot.slane %v472, 4
    %vm476 = vcmask 1043456
    %v477 = vsel %vm476, %v473, %v474
    %vm478 = vcmask 1039360
    %v479 = vsel %vm478, %v468, %v477
    %v480 = vsel %vm476, %v474, %v475
    %v481 = vsel %vm478, %v470, %v480
    %vm485 = vcmask 1042433
    %vm486 = vsmask.f32 7942
    %vm487 = vmand %vm485, %vm486
    %vm488 = vcmask 1046533
    %vm489 = vsmask.f32 7958
    %vm490 = vmand %vm488, %vm489
    %vm491 = vmor %vm490, %vm487
    %v492 = vld [vmem:[#allocation3] sm:$0x66]
    %v493 = vsel %vm491, %v479, %v492
    %494 = vst [vmem:[#allocation3] sm:$0x66] %v493
    %v495 = vld [vmem:[#allocation3 + $0x8] sm:$0x66]
    %v496 = vsel %vm491, %v481, %v495
    %497 = vst [vmem:[#allocation3 + $0x8] sm:$0x66] %v496
    %vm498 = vcmask 550913
    %vm499 = vmand %vm498, %vm486
    %v500 = vld [vmem:[#allocation3 + $0x10] sm:$0x6]
    %v501 = vsel %vm499, %v472, %v500
    %502 = vst [vmem:[#allocation3 + $0x10] sm:$0x6] %v501
    %v503 = vld [vmem:[#allocation2] sm:$0xff]
    %v504 = vld [vmem:[#allocation2 + $0x8] sm:$0x3]
    %v510 = vcombine.low %v334, %v335
    %v511 = vcombine.low %v336, %v337
    %v513 = vunpack.c.l.s4 1983009808
    %v514 = vunpack.c.0.s8 %v513
    %v515 = vlaneseq
    %v516 = vshrl.u32 %v515, 7
    %v517 = vsub.s32 %v514, %v516
    %v518 = vrot.slane %v510, %v517
    %v520 = vunpack.c.l.s4 1983009808
    %v521 = vunpack.c.0.s8 %v520
    %v522 = vlaneseq
    %v523 = vshrl.u32 %v522, 7
    %v524 = vsub.s32 %v521, %v523
    %v525 = vrot.slane %v511, %v524
    %v526 = vcombine.low %v518, %v525
    %v528 = vunpack.c.l.s4 1983009808
    %v529 = vunpack.c.0.s8 %v528
    %v530 = vlaneseq
    %v531 = vshrl.u32 %v530, 7
    %v532 = vsub.s32 %v529, %v531
    %v533 = vrot.slane %v338, %v532
    %534 = vrot.lane.b32.xlu0 %v526, 2
    %v535 = vpop.permute.xlu0 %534
    %536 = vrot.lane.b32.xlu0 %v533, 2
    %v537 = vpop.permute.xlu0 %536
    %v538 = vrot.slane %v535, 6
    %vm539 = vcmask 15360
    %v540 = vsel %vm539, %v538, %v535
    %v541 = vsel %vm539, %v538, %v537
    %v544 = vmul.bf16 %v503, %v540
    %v545 = vmul.bf16 %v504, %v541
    %v548 = vcombine.high %v544, %v544
    %v550 = vunpack.c.l.s4 1983009808
    %v551 = vunpack.c.0.s8 %v550
    %v552 = vlaneseq
    %v553 = vshrl.u32 %v552, 7
    %v554 = vsub.s32 %v551, %v553
    %v555 = vrot.slane %v544, %v554
    %v557 = vunpack.c.l.s4 1983009808
    %v558 = vunpack.c.0.s8 %v557
    %v559 = vlaneseq
    %v560 = vshrl.u32 %v559, 7
    %v561 = vsub.s32 %v558, %v560
    %v562 = vrot.slane %v548, %v561
    %v564 = vunpack.c.l.s4 1983009808
    %v565 = vunpack.c.0.s8 %v564
    %v566 = vlaneseq
    %v567 = vshrl.u32 %v566, 7
    %v568 = vsub.s32 %v565, %v567
    %v569 = vrot.slane %v545, %v568
    %v570 = vrot.slane %v555, 5
    %v571 = vrot.slane %v562, 5
    %v572 = vrot.slane %v569, 5
    %v573 = vrot.slane %v570, 4
    %v574 = vrot.slane %v571, 4
    %v575 = vrot.slane %v572, 4
    %576 = vrot.lane.b32.xlu0 %v570, 126
    %v577 = vpop.permute.xlu0 %576
    %578 = vrot.lane.b32.xlu0 %v571, 126
    %v579 = vpop.permute.xlu0 %578
    %580 = vrot.lane.b32.xlu0 %v572, 126
    %v581 = vpop.permute.xlu0 %580
    %582 = vrot.lane.b32.xlu0 %v573, 126
    %v583 = vpop.permute.xlu0 %582
    %584 = vrot.lane.b32.xlu0 %v574, 126
    %v585 = vpop.permute.xlu0 %584
    %586 = vrot.lane.b32.xlu0 %v575, 126
    %v587 = vpop.permute.xlu0 %586
    %v588 = vrot.slane %v577, 4
    %v589 = vrot.slane %v579, 4
    %v590 = vrot.slane %v581, 4
    %v591 = vrot.slane %v583, 4
    %v592 = vrot.slane %v585, 4
    %v593 = vrot.slane %v587, 4
    %v594 = vsel %vm476, %v588, %v589
    %vm595 = vcmask 1031168
    %v596 = vsel %vm595, %v577, %v594
    %v597 = vsel %vm476, %v589, %v590
    %v598 = vsel %vm595, %v579, %v597
    %v599 = vsel %vm476, %v591, %v592
    %v600 = vsel %vm595, %v583, %v599
    %v601 = vsel %vm476, %v592, %v593
    %v602 = vsel %vm595, %v585, %v601
    %609 = vst [vmem:[#allocation3] sm:$0x88] %v596
    %610 = vst [vmem:[#allocation3 + $0x8] sm:$0x88] %v598
    %vm611 = vcmask 551939
    %612 = vst.msk [vmem:[#allocation3 + $0x10] sm:$0x8] %vm611, %v581
    %vm613 = vcmask 1040384
    %vm614 = vsmask.f32 256
    %vm615 = vmand %vm613, %vm614
    %vm616 = vcmask 1044484
    %vm617 = vsmask.f32 4352
    %vm618 = vmand %vm616, %vm617
    %vm619 = vmor %vm618, %vm615
    %v620 = vld [vmem:[#allocation3 + $0x14] sm:$0x11]
    %v621 = vsel %vm619, %v600, %v620
    %622 = vst [vmem:[#allocation3 + $0x14] sm:$0x11] %v621
    %v623 = vld [vmem:[#allocation3 + $0x1c] sm:$0x11]
    %v624 = vsel %vm619, %v602, %v623
    %625 = vst [vmem:[#allocation3 + $0x1c] sm:$0x11] %v624
    %vm626 = vcmask 548864
    %vm627 = vmand %vm626, %vm614
    %v628 = vld [vmem:[#allocation3 + $0x24] sm:$0x1]
    %v629 = vsel %vm627, %v587, %v628
    %630 = vst [vmem:[#allocation3 + $0x24] sm:$0x1] %v629
    %v631 = vld [vmem:[#allocation2] sm:$0xff]
    %v632 = vld [vmem:[#allocation2 + $0x8] sm:$0x3]
    %633 = vrot.lane.b32.xlu0 %v362, 16
    %v634 = vpop.permute.xlu0 %633
    %635 = vrot.lane.b32.xlu0 %v369, 16
    %v636 = vpop.permute.xlu0 %635
    %v637 = vrot.slane %v634, 6
    %vm638 = vcmask 130048
    %v639 = vsel %vm638, %v637, %v634
    %v640 = vsel %vm638, %v637, %v636
    %v643 = vmul.bf16 %v631, %v639
    %v644 = vmul.bf16 %v632, %v640
    %v647 = vcombine.high %v643, %v643
    %v649 = vunpack.c.l.s4 1983009808
    %v650 = vunpack.c.0.s8 %v649
    %v651 = vlaneseq
    %v652 = vshrl.u32 %v651, 7
    %v653 = vsub.s32 %v650, %v652
    %v654 = vrot.slane %v643, %v653
    %v656 = vunpack.c.l.s4 1983009808
    %v657 = vunpack.c.0.s8 %v656
    %v658 = vlaneseq
    %v659 = vshrl.u32 %v658, 7
    %v660 = vsub.s32 %v657, %v659
    %v661 = vrot.slane %v647, %v660
    %v663 = vunpack.c.l.s4 1983009808
    %v664 = vunpack.c.0.s8 %v663
    %v665 = vlaneseq
    %v666 = vshrl.u32 %v665, 7
    %v667 = vsub.s32 %v664, %v666
    %v668 = vrot.slane %v644, %v667
    %v670 = vshrl.u32 %v654, 16
    %v672 = vrot.slane %v670, 7
    %v673 = vshll.u32 %v654, 16
    %v675 = vor.u32 %v672, %v673
    %v677 = vshrl.u32 %v661, 16
    %v679 = vrot.slane %v677, 7
    %v680 = vshll.u32 %v661, 16
    %v682 = vor.u32 %v679, %v680
    %v684 = vshrl.u32 %v668, 16
    %v686 = vrot.slane %v684, 7
    %v687 = vshll.u32 %v668, 16
    %v689 = vor.u32 %v686, %v687
    %690 = vrot.lane.b32.xlu0 %v675, 112
    %v691 = vpop.permute.xlu0 %690
    %692 = vrot.lane.b32.xlu0 %v682, 112
    %v693 = vpop.permute.xlu0 %692
    %694 = vrot.lane.b32.xlu0 %v689, 112
    %v695 = vpop.permute.xlu0 %694
    %v696 = vrot.slane %v691, 4
    %v697 = vrot.slane %v693, 4
    %v698 = vrot.slane %v695, 4
    %v699 = vsel %vm476, %v696, %v697
    %vm700 = vcmask 916480
    %v701 = vsel %vm700, %v691, %v699
    %v702 = vsel %vm476, %v697, %v698
    %v703 = vsel %vm700, %v693, %v702
    %vm707 = vsmask.f32 7938
    %vm708 = vmand %vm401, %vm707
    %vm709 = vsmask.f32 7954
    %vm710 = vmand %vm403, %vm709
    %vm711 = vmor %vm710, %vm708
    %v712 = vld [vmem:[#allocation3 + $0x14] sm:$0x33]
    %v713 = vsel %vm711, %v701, %v712
    %714 = vst [vmem:[#allocation3 + $0x14] sm:$0x33] %v713
    %v715 = vld [vmem:[#allocation3 + $0x1c] sm:$0x33]
    %v716 = vsel %vm711, %v703, %v715
    %717 = vst [vmem:[#allocation3 + $0x1c] sm:$0x33] %v716
    %vm718 = vmand %vm412, %vm707
    %v719 = vld [vmem:[#allocation3 + $0x24] sm:$0x3]
    %v720 = vsel %vm718, %v695, %v719
    %721 = vst [vmem:[#allocation3 + $0x24] sm:$0x3] %v720
    %v722 = vld [vmem:[#allocation2] sm:$0xff]
    %v723 = vld [vmem:[#allocation2 + $0x8] sm:$0x3]
    %v726 = vcombine.low %v722, %v722
    %v728 = vunpack.c.l.s4 1983009808
    %v729 = vunpack.c.0.s8 %v728
    %v730 = vlaneseq
    %v731 = vshrl.u32 %v730, 7
    %v732 = vsub.s32 %v729, %v731
    %v733 = vrot.slane %v726, %v732
    %v735 = vunpack.c.l.s4 1983009808
    %v736 = vunpack.c.0.s8 %v735
    %v737 = vlaneseq
    %v738 = vshrl.u32 %v737, 7
    %v739 = vsub.s32 %v736, %v738
    %v740 = vrot.slane %v722, %v739
    %v741 = vcombine.low %v723, %v723
    %v743 = vunpack.c.l.s4 1983009808
    %v744 = vunpack.c.0.s8 %v743
    %v745 = vlaneseq
    %v746 = vshrl.u32 %v745, 7
    %v747 = vsub.s32 %v744, %v746
    %v748 = vrot.slane %v741, %v747
    %749 = vrot.lane.b32.xlu0 %v733, 111
    %v750 = vpop.permute.xlu0 %749
    %751 = vrot.lane.b32.xlu0 %v740, 111
    %v752 = vpop.permute.xlu0 %751
    %753 = vrot.lane.b32.xlu0 %v748, 111
    %v754 = vpop.permute.xlu0 %753
    %v755 = vrot.slane %v750, 4
    %v756 = vrot.slane %v752, 4
    %v757 = vrot.slane %v754, 4
    %v758 = vsel %vm476, %v755, %v756
    %vm759 = vcmask 908288
    %v760 = vsel %vm759, %v750, %v758
    %v761 = vsel %vm476, %v756, %v757
    %v762 = vsel %vm759, %v752, %v761
    %vm766 = vcmask 1047558
    %vm767 = vsmask.f32 7424
    %vm768 = vmand %vm766, %vm767
    %vm769 = vmor %vm768, %vm106
    %v770 = vld [vmem:[#allocation3 + $0x14] sm:$0xcc]
    %v771 = vsel %vm769, %v760, %v770
    %772 = vst [vmem:[#allocation3 + $0x14] sm:$0xcc] %v771
    %v773 = vld [vmem:[#allocation3 + $0x1c] sm:$0xcc]
    %v774 = vsel %vm769, %v762, %v773
    %775 = vst [vmem:[#allocation3 + $0x1c] sm:$0xcc] %v774
    %vm776 = vcmask 551938
    %vm777 = vmand %vm776, %vm105
    %v778 = vld [vmem:[#allocation3 + $0x24] sm:$0xc]
    %v779 = vsel %vm777, %v754, %v778
    %780 = vst [vmem:[#allocation3 + $0x24] sm:$0xc] %v779
    %v781 = vld [vmem:[#allocation2] sm:$0xff]
    %v782 = vld [vmem:[#allocation2 + $0x8] sm:$0x3]
    %783 = vrot.lane.b32.xlu0 %v526, 18
    %v784 = vpop.permute.xlu0 %783
    %785 = vrot.lane.b32.xlu0 %v533, 18
    %v786 = vpop.permute.xlu0 %785
    %v787 = vrot.slane %v784, 6
    %vm788 = vcmask 146432
    %v789 = vsel %vm788, %v787, %v784
    %v790 = vsel %vm788, %v787, %v786
    %v793 = vmul.bf16 %v781, %v789
    %v794 = vmul.bf16 %v782, %v790
    %v797 = vcombine.high %v793, %v793
    %v799 = vunpack.c.l.s4 1983009808
    %v800 = vunpack.c.0.s8 %v799
    %v801 = vlaneseq
    %v802 = vshrl.u32 %v801, 7
    %v803 = vsub.s32 %v800, %v802
    %v804 = vrot.slane %v793, %v803
    %v806 = vunpack.c.l.s4 1983009808
    %v807 = vunpack.c.0.s8 %v806
    %v808 = vlaneseq
    %v809 = vshrl.u32 %v808, 7
    %v810 = vsub.s32 %v807, %v809
    %v811 = vrot.slane %v797, %v810
    %v813 = vunpack.c.l.s4 1983009808
    %v814 = vunpack.c.0.s8 %v813
    %v815 = vlaneseq
    %v816 = vshrl.u32 %v815, 7
    %v817 = vsub.s32 %v814, %v816
    %v818 = vrot.slane %v794, %v817
    %v820 = vshll.u32 %v804, 16
    %v822 = vrot.slane %v820, 5
    %v824 = vshll.u32 %v811, 16
    %v826 = vrot.slane %v824, 5
    %v828 = vshll.u32 %v818, 16
    %v830 = vrot.slane %v828, 5
    %v831 = vshrl.u32 %v804, 16
    %v833 = vrot.slane %v831, 4
    %v834 = vor.u32 %v833, %v822
    %v835 = vrot.slane %v834, 4
    %v836 = vshrl.u32 %v811, 16
    %v838 = vrot.slane %v836, 4
    %v839 = vor.u32 %v838, %v826
    %v840 = vrot.slane %v839, 4
    %v841 = vshrl.u32 %v818, 16
    %v843 = vrot.slane %v841, 4
    %v844 = vor.u32 %v843, %v830
    %v845 = vrot.slane %v844, 4
    %846 = vrot.lane.b32.xlu0 %v822, 110
    %v847 = vpop.permute.xlu0 %846
    %848 = vrot.lane.b32.xlu0 %v826, 110
    %v849 = vpop.permute.xlu0 %848
    %850 = vrot.lane.b32.xlu0 %v830, 110
    %v851 = vpop.permute.xlu0 %850
    %852 = vrot.lane.b32.xlu0 %v835, 110
    %v853 = vpop.permute.xlu0 %852
    %854 = vrot.lane.b32.xlu0 %v840, 110
    %v855 = vpop.permute.xlu0 %854
    %856 = vrot.lane.b32.xlu0 %v845, 110
    %v857 = vpop.permute.xlu0 %856
    %v858 = vrot.slane %v847, 4
    %v859 = vrot.slane %v849, 4
    %v860 = vrot.slane %v851, 4
    %v861 = vrot.slane %v853, 4
    %v862 = vrot.slane %v855, 4
    %v863 = vrot.slane %v857, 4
    %v864 = vsel %vm476, %v858, %v859
    %vm865 = vcmask 900096
    %v866 = vsel %vm865, %v847, %v864
    %v867 = vsel %vm476, %v859, %v860
    %v868 = vsel %vm865, %v849, %v867
    %v869 = vsel %vm476, %v861, %v862
    %v870 = vsel %vm865, %v853, %v869
    %v871 = vsel %vm476, %v862, %v863
    %v872 = vsel %vm865, %v855, %v871
    %vm879 = vcmask 1043459
    %vm880 = vsmask.f32 7950
    %vm881 = vmand %vm879, %vm880
    %vm882 = vcmask 1047559
    %vm883 = vsmask.f32 7966
    %vm884 = vmand %vm882, %vm883
    %vm885 = vmor %vm884, %vm881
    %v886 = vld [vmem:[#allocation3 + $0x14] sm:$0x88]
    %v887 = vsel %vm885, %v866, %v886
    %888 = vst [vmem:[#allocation3 + $0x14] sm:$0x88] %v887
    %v889 = vld [vmem:[#allocation3 + $0x1c] sm:$0x88]
    %v890 = vsel %vm885, %v868, %v889
    %891 = vst [vmem:[#allocation3 + $0x1c] sm:$0x88] %v890
    %vm892 = vcmask 551939
    %vm893 = vmand %vm892, %vm880
    %v894 = vld [vmem:[#allocation3 + $0x24] sm:$0x8]
    %v895 = vsel %vm893, %v851, %v894
    %896 = vst [vmem:[#allocation3 + $0x24] sm:$0x8] %v895
    %897 = vst [vmem:[#allocation3 + $0x28] sm:$0x11] %v870
    %898 = vst [vmem:[#allocation3 + $0x30] sm:$0x11] %v872
    %vm899 = vcmask 548864
    %900 = vst.msk [vmem:[#allocation3 + $0x38] sm:$0x1] %vm899, %v857
    %v901 = vld [vmem:[#allocation2] sm:$0xff]
    %v902 = vld [vmem:[#allocation2 + $0x8] sm:$0x3]
    %903 = vrot.lane.b32.xlu0 %v362, 32
    %v904 = vpop.permute.xlu0 %903
    %905 = vrot.lane.b32.xlu0 %v369, 32
    %v906 = vpop.permute.xlu0 %905
    %v907 = vrot.slane %v904, 6
    %vm908 = vcmask 261120
    %v909 = vsel %vm908, %v907, %v904
    %v910 = vsel %vm908, %v907, %v906
    %v913 = vmul.bf16 %v901, %v909
    %v914 = vmul.bf16 %v902, %v910
    %v917 = vcombine.high %v913, %v913
    %v919 = vunpack.c.l.s4 1983009808
    %v920 = vunpack.c.0.s8 %v919
    %v921 = vlaneseq
    %v922 = vshrl.u32 %v921, 7
    %v923 = vsub.s32 %v920, %v922
    %v924 = vrot.slane %v913, %v923
    %v926 = vunpack.c.l.s4 1983009808
    %v927 = vunpack.c.0.s8 %v926
    %v928 = vlaneseq
    %v929 = vshrl.u32 %v928, 7
    %v930 = vsub.s32 %v927, %v929
    %v931 = vrot.slane %v917, %v930
    %v933 = vunpack.c.l.s4 1983009808
    %v934 = vunpack.c.0.s8 %v933
    %v935 = vlaneseq
    %v936 = vshrl.u32 %v935, 7
    %v937 = vsub.s32 %v934, %v936
    %v938 = vrot.slane %v914, %v937
    %v939 = vrot.slane %v924, 7
    %v940 = vrot.slane %v931, 7
    %v941 = vrot.slane %v938, 7
    %942 = vrot.lane.b32.xlu0 %v939, 96
    %v943 = vpop.permute.xlu0 %942
    %944 = vrot.lane.b32.xlu0 %v940, 96
    %v945 = vpop.permute.xlu0 %944
    %946 = vrot.lane.b32.xlu0 %v941, 96
    %v947 = vpop.permute.xlu0 %946
    %v948 = vrot.slane %v943, 4
    %v949 = vrot.slane %v945, 4
    %v950 = vrot.slane %v947, 4
    %v951 = vsel %vm476, %v948, %v949
    %vm952 = vcmask 785408
    %v953 = vsel %vm952, %v943, %v951
    %v954 = vsel %vm476, %v949, %v950
    %v955 = vsel %vm952, %v945, %v954
    %vm959 = vsmask.f32 2304
    %vm960 = vmand %vm485, %vm959
    %vm961 = vsmask.f32 6400
    %vm962 = vmand %vm488, %vm961
    %vm963 = vmor %vm962, %vm960
    %v964 = vld [vmem:[#allocation3 + $0x28] sm:$0x66]
    %v965 = vsel %vm963, %v953, %v964
    %966 = vst [vmem:[#allocation3 + $0x28] sm:$0x66] %v965
    %v967 = vld [vmem:[#allocation3 + $0x30] sm:$0x66]
    %v968 = vsel %vm963, %v955, %v967
    %969 = vst [vmem:[#allocation3 + $0x30] sm:$0x66] %v968
    %vm970 = vmand %vm498, %vm959
    %v971 = vld [vmem:[#allocation3 + $0x38] sm:$0x6]
    %v972 = vsel %vm970, %v947, %v971
    %973 = vst [vmem:[#allocation3 + $0x38] sm:$0x6] %v972
    %v974 = vld [vmem:[#allocation2] sm:$0xff]
    %v975 = vld [vmem:[#allocation2 + $0x8] sm:$0x3]
    %v978 = vcombine.high %v974, %v974
    %v980 = vunpack.c.l.s4 1983009808
    %v981 = vunpack.c.0.s8 %v980
    %v982 = vlaneseq
    %v983 = vshrl.u32 %v982, 7
    %v984 = vsub.s32 %v981, %v983
    %v985 = vrot.slane %v974, %v984
    %v987 = vunpack.c.l.s4 1983009808
    %v988 = vunpack.c.0.s8 %v987
    %v989 = vlaneseq
    %v990 = vshrl.u32 %v989, 7
    %v991 = vsub.s32 %v988, %v990
    %v992 = vrot.slane %v978, %v991
    %v994 = vunpack.c.l.s4 1983009808
    %v995 = vunpack.c.0.s8 %v994
    %v996 = vlaneseq
    %v997 = vshrl.u32 %v996, 7
    %v998 = vsub.s32 %v995, %v997
    %v999 = vrot.slane %v975, %v998
    %v1001 = vshrl.u32 %v985, 16
    %v1003 = vrot.slane %v1001, 5
    %v1004 = vshll.u32 %v985, 16
    %v1006 = vrot.slane %v1004, 6
    %v1007 = vor.u32 %v1003, %v1006
    %v1009 = vshrl.u32 %v992, 16
    %v1011 = vrot.slane %v1009, 5
    %v1012 = vshll.u32 %v992, 16
    %v1014 = vrot.slane %v1012, 6
    %v1015 = vor.u32 %v1011, %v1014
    %v1017 = vshrl.u32 %v999, 16
    %v1019 = vrot.slane %v1017, 5
    %v1020 = vshll.u32 %v999, 16
    %v1022 = vrot.slane %v1020, 6
    %v1023 = vor.u32 %v1019, %v1022
    %1024 = vrot.lane.b32.xlu0 %v1007, 95
    %v1025 = vpop.permute.xlu0 %1024
    %1026 = vrot.lane.b32.xlu0 %v1015, 95
    %v1027 = vpop.permute.xlu0 %1026
    %1028 = vrot.lane.b32.xlu0 %v1023, 95
    %v1029 = vpop.permute.xlu0 %1028
    %v1030 = vrot.slane %v1025, 4
    %v1031 = vrot.slane %v1027, 4
    %v1032 = vrot.slane %v1029, 4
    %v1033 = vsel %vm476, %v1030, %v1031
    %vm1034 = vcmask 777216
    %v1035 = vsel %vm1034, %v1025, %v1033
    %v1036 = vsel %vm476, %v1031, %v1032
    %v1037 = vsel %vm1034, %v1027, %v1036
    %vm1041 = vsmask.f32 7946
    %vm1042 = vmand %vm104, %vm1041
    %vm1043 = vsmask.f32 7962
    %vm1044 = vmand %vm766, %vm1043
    %vm1045 = vmor %vm1044, %vm1042
    %v1046 = vld [vmem:[#allocation3 + $0x28] sm:$0xcc]
    %v1047 = vsel %vm1045, %v1035, %v1046
    %1048 = vst [vmem:[#allocation3 + $0x28] sm:$0xcc] %v1047
    %v1049 = vld [vmem:[#allocation3 + $0x30] sm:$0xcc]
    %v1050 = vsel %vm1045, %v1037, %v1049
    %1051 = vst [vmem:[#allocation3 + $0x30] sm:$0xcc] %v1050
    %vm1052 = vmand %vm776, %vm1041
    %v1053 = vld [vmem:[#allocation3 + $0x38] sm:$0xc]
    %v1054 = vsel %vm1052, %v1029, %v1053
    %1055 = vst [vmem:[#allocation3 + $0x38] sm:$0xc] %v1054
    %v1056 = vld [vmem:[#allocation2] sm:$0xff]
    %v1057 = vld [vmem:[#allocation2 + $0x8] sm:$0x3]
    %1058 = vrot.lane.b32.xlu0 %v526, 34
    %v1059 = vpop.permute.xlu0 %1058
    %1060 = vrot.lane.b32.xlu0 %v533, 34
    %v1061 = vpop.permute.xlu0 %1060
    %v1062 = vrot.slane %v1059, 6
    %vm1063 = vcmask 277504
    %v1064 = vsel %vm1063, %v1062, %v1059
    %v1065 = vsel %vm1063, %v1062, %v1061
    %v1068 = vmul.bf16 %v1056, %v1064
    %v1069 = vmul.bf16 %v1057, %v1065
    %v1072 = vcombine.high %v1068, %v1068
    %v1074 = vunpack.c.l.s4 1983009808
    %v1075 = vunpack.c.0.s8 %v1074
    %v1076 = vlaneseq
    %v1077 = vshrl.u32 %v1076, 7
    %v1078 = vsub.s32 %v1075, %v1077
    %v1079 = vrot.slane %v1068, %v1078
    %v1081 = vunpack.c.l.s4 1983009808
    %v1082 = vunpack.c.0.s8 %v1081
    %v1083 = vlaneseq
    %v1084 = vshrl.u32 %v1083, 7
    %v1085 = vsub.s32 %v1082, %v1084
    %v1086 = vrot.slane %v1072, %v1085
    %v1088 = vunpack.c.l.s4 1983009808
    %v1089 = vunpack.c.0.s8 %v1088
    %v1090 = vlaneseq
    %v1091 = vshrl.u32 %v1090, 7
    %v1092 = vsub.s32 %v1089, %v1091
    %v1093 = vrot.slane %v1069, %v1092
    %1094 = vrot.lane.b32.xlu0 %v1079, 94
    %v1095 = vpop.permute.xlu0 %1094
    %1096 = vrot.lane.b32.xlu0 %v1086, 94
    %v1097 = vpop.permute.xlu0 %1096
    %1098 = vrot.lane.b32.xlu0 %v1093, 94
    %v1099 = vpop.permute.xlu0 %1098
    %v1100 = vrot.slane %v1095, 4
    %v1101 = vrot.slane %v1097, 4
    %v1102 = vrot.slane %v1099, 4
    %v1103 = vsel %vm476, %v1100, %v1101
    %vm1104 = vcmask 769024
    %v1105 = vsel %vm1104, %v1095, %v1103
    %v1106 = vsel %vm476, %v1101, %v1102
    %v1107 = vsel %vm1104, %v1097, %v1106
    %v1111 = vld [vmem:[#allocation3 + $0x3c] sm:$0x33]
    %v1112 = vsel %vm405, %v1105, %v1111
    %1113 = vst [vmem:[#allocation3 + $0x3c] sm:$0x33] %v1112
    %v1114 = vld [vmem:[#allocation3 + $0x44] sm:$0x33]
    %v1115 = vsel %vm405, %v1107, %v1114
    %1116 = vst [vmem:[#allocation3 + $0x44] sm:$0x33] %v1115
    %v1117 = vld [vmem:[#allocation3 + $0x4c] sm:$0x3]
    %v1118 = vsel %vm413, %v1099, %v1117
    %1119 = vst [vmem:[#allocation3 + $0x4c] sm:$0x3] %v1118
    %v1120 = vld [vmem:[#allocation7] sm:$0xf]
    %v1121 = vld [vmem:[#allocation7 + $0x4] sm:$0xf]
    %v1122 = vld [vmem:[#allocation7 + $0x8] sm:$0xf]
    %v1123 = vld [vmem:[#allocation7 + $0xc] sm:$0xf]
    %v1124 = vld [vmem:[#allocation3] sm:$0xff]
    %v1125 = vld [vmem:[#allocation3 + $0x8] sm:$0xff]
    %v1126 = vld [vmem:[#allocation3 + $0x10] sm:$0xf]
    %v1127 = vld [vmem:[#allocation3 + $0x14] sm:$0xff]
    %v1128 = vld [vmem:[#allocation3 + $0x1c] sm:$0xff]
    %v1129 = vld [vmem:[#allocation3 + $0x24] sm:$0xf]
    %v1130 = vld [vmem:[#allocation3 + $0x28] sm:$0xff]
    %v1131 = vld [vmem:[#allocation3 + $0x30] sm:$0xff]
    %v1132 = vld [vmem:[#allocation3 + $0x38] sm:$0xf]
    %v1133 = vld [vmem:[#allocation3 + $0x3c] sm:$0x33]
    %v1134 = vld [vmem:[#allocation3 + $0x44] sm:$0x33]
    %v1135 = vld [vmem:[#allocation3 + $0x4c] sm:$0x3]
    %v1136 = vld [vmem:[#allocation9] sm:$0xff]
    %v1137 = vld [vmem:[#allocation9 + $0x8] sm:$0xff]
    %v1138 = vld [vmem:[#allocation9 + $0x10] sm:$0xff]
    %v1139 = vld [vmem:[#allocation9 + $0x18] sm:$0xff]
    %1141 = vset.pattern.permute.xlu0 0
    %1142 = vperm.xlu0 %1141, %v1136
    %v1143 = vpop.permute.xlu0 %1142
    %1146 = vset.pattern.permute.xlu0 0
    %1147 = vperm.xlu0 %1146, %v1137
    %v1148 = vpop.permute.xlu0 %1147
    %1151 = vset.pattern.permute.xlu0 0
    %1152 = vperm.xlu0 %1151, %v1138
    %v1153 = vpop.permute.xlu0 %1152
    %1156 = vset.pattern.permute.xlu0 0
    %1157 = vperm.xlu0 %1156, %v1139
    %v1158 = vpop.permute.xlu0 %1157
    %v1164 = vunpack.c.l.b16 %v1120
    %v1165 = vunpack.c.l.b16 %v1121
    %v1166 = vunpack.c.l.b16 %v1122
    %v1167 = vunpack.c.l.b16 %v1123
    %v1168 = vpack.c.b16 %v1165, %v1164
    %v1169 = vpack.c.b16 %v1167, %v1166
    %v1182 = vunpack.c.l.b16 %v1124
    %v1183 = vunpack.c.h.b16 %v1124
    %v1184 = vunpack.c.l.b16 %v1125
    %v1185 = vunpack.c.h.b16 %v1125
    %v1186 = vunpack.c.l.b16 %v1126
    %v1187 = vunpack.c.l.b16 %v1127
    %v1188 = vunpack.c.h.b16 %v1127
    %v1189 = vunpack.c.l.b16 %v1128
    %v1190 = vunpack.c.h.b16 %v1128
    %v1191 = vunpack.c.l.b16 %v1129
    %v1192 = vunpack.c.l.b16 %v1130
    %v1193 = vunpack.c.h.b16 %v1130
    %v1194 = vunpack.c.l.b16 %v1131
    %v1195 = vunpack.c.h.b16 %v1131
    %v1196 = vunpack.c.l.b16 %v1132
    %v1197 = vunpack.c.l.b16 %v1133
    %v1198 = vunpack.c.h.b16 %v1133
    %v1199 = vunpack.c.l.b16 %v1134
    %v1200 = vunpack.c.h.b16 %v1134
    %v1201 = vunpack.c.l.b16 %v1135
    %v1202 = vpack.c.b16 %v1187, %v1182
    %v1203 = vpack.c.b16 %v1188, %v1183
    %v1204 = vpack.c.b16 %v1189, %v1184
    %v1205 = vpack.c.b16 %v1190, %v1185
    %v1206 = vpack.c.b16 %v1191, %v1186
    %v1207 = vpack.c.b16 %v1197, %v1192
    %v1208 = vpack.c.b16 %v1198, %v1193
    %v1209 = vpack.c.b16 %v1199, %v1194
    %v1210 = vpack.c.b16 %v1200, %v1195
    %v1211 = vpack.c.b16 %v1201, %v1196
    %vm1217 = vcmask 220160
    %v1219 = vsel %vm1217, %v1168, 0
    %v1222 = vsel %vm1217, %v1169, 0
    %vm1224 = vcmask 1044480
    %vm1225 = vcmask 1045504
    %v1226 = vsel %vm1224, 4294967295, 65535
    %v1227 = vsel %vm1225, %v1226, 0
    %v1229 = vand.u32 %v1207, %v1227
    %v1232 = vand.u32 %v1208, %v1227
    %v1235 = vand.u32 %v1209, %v1227
    %v1238 = vand.u32 %v1210, %v1227
    %v1241 = vand.u32 %v1211, %v1227
    %1243 = vmatprep.subr.bf16.mxu0 %v1203
    %1244 = vmatpush1.bf16.msra.mxu0 %v1202
    %1245 = vmatprep.subr.bf16.mxu0 %v1232
    %1246 = vmatpush1.bf16.msra.mxu0 %v1229
    %1247 = vmatprep.subr.bf16.mxu0 0
    %1248 = vmatpush1.bf16.msra.mxu0 0
    %1249 = vmatprep.subr.bf16.mxu0 0
    %1250 = vmatpush1.bf16.msra.mxu0 0
    %1251 = vmatprep.subr.bf16.mxu0 0
    %1252 = vmatpush1.bf16.msra.mxu0 0
    %1253 = vmatprep.subr.bf16.mxu0 0
    %1254 = vmatpush1.bf16.msra.mxu0 0
    %1255 = vmatprep.subr.bf16.mxu0 0
    %1256 = vmatpush1.bf16.msra.mxu0 0
    %1257 = vmatprep.subr.bf16.mxu0 0
    %1258 = vmatpush1.bf16.msra.mxu0 0
    %1259 = vmatprep.subr.bf16.mxu0 0
    %1260 = vmatpush1.bf16.msra.mxu0 0
    %1261 = vmatprep.subr.bf16.mxu0 0
    %1262 = vmatpush1.bf16.msra.mxu0 0
    %1263 = vmatprep.subr.bf16.mxu0 0
    %1264 = vmatpush1.bf16.msra.mxu0 0
    %1265 = vmatprep.subr.bf16.mxu0 0
    %1266 = vmatpush1.bf16.msra.mxu0 0
    %1267 = vmatprep.subr.bf16.mxu0 0
    %1268 = vmatpush1.bf16.msra.mxu0 0
    %1269 = vmatprep.subr.bf16.mxu0 0
    %1270 = vmatpush1.bf16.msra.mxu0 0
    %1271 = vmatprep.subr.bf16.mxu0 0
    %1272 = vmatpush1.bf16.msra.mxu0 0
    %1273 = vmatprep.subr.bf16.mxu0 0
    %1274 = vmatpush1.bf16.msra.mxu0 0
    %1275 = vmatprep.mubr.bf16.mxu0 0
    %1276 = vmatmul.mubr.bf16.gmra.mrb[0].mxu0 %v1219
    %v1277 = vpop.f32.mrb[0].mxu0
    %v1278 = vadd.f32 %v1143, %v1277
    %v1279 = vpop.f32.mrb[0].mxu0
    %v1280 = vadd.f32 %v1143, %v1279
    %v1281 = vpop.f32.mrb[0].mxu0
    %v1282 = vadd.f32 %v1148, %v1281
    %v1283 = vpop.f32.mrb[0].mxu0
    %v1284 = vadd.f32 %v1148, %v1283
    %1285 = vmatprep.mubr.bf16.mxu0 0
    %1286 = vmatmul.mubr.bf16.gmra.mrb[0].mxu0 %v1222
    %v1287 = vpop.f32.mrb[0].mxu0
    %v1288 = vadd.f32 %v1153, %v1287
    %v1289 = vpop.f32.mrb[0].mxu0
    %v1290 = vadd.f32 %v1153, %v1289
    %v1291 = vpop.f32.mrb[0].mxu0
    %v1292 = vadd.f32 %v1158, %v1291
    %v1293 = vpop.f32.mrb[0].mxu0
    %v1294 = vadd.f32 %v1158, %v1293
    %1295 = vdwg.mxu0
    %1296 = vmatprep.subr.bf16.mxu0 %v1205
    %1297 = vmatpush1.bf16.msra.mxu0 %v1204
    %1298 = vmatprep.subr.bf16.mxu0 %v1238
    %1299 = vmatpush1.bf16.msra.mxu0 %v1235
    %1300 = vmatprep.subr.bf16.mxu0 0
    %1301 = vmatpush1.bf16.msra.mxu0 0
    %1302 = vmatprep.subr.bf16.mxu0 0
    %1303 = vmatpush1.bf16.msra.mxu0 0
    %1304 = vmatprep.subr.bf16.mxu0 0
    %1305 = vmatpush1.bf16.msra.mxu0 0
    %1306 = vmatprep.subr.bf16.mxu0 0
    %1307 = vmatpush1.bf16.msra.mxu0 0
    %1308 = vmatprep.subr.bf16.mxu0 0
    %1309 = vmatpush1.bf16.msra.mxu0 0
    %1310 = vmatprep.subr.bf16.mxu0 0
    %1311 = vmatpush1.bf16.msra.mxu0 0
    %1312 = vmatprep.subr.bf16.mxu0 0
    %1313 = vmatpush1.bf16.msra.mxu0 0
    %1314 = vmatprep.subr.bf16.mxu0 0
    %1315 = vmatpush1.bf16.msra.mxu0 0
    %1316 = vmatprep.subr.bf16.mxu0 0
    %1317 = vmatpush1.bf16.msra.mxu0 0
    %1318 = vmatprep.subr.bf16.mxu0 0
    %1319 = vmatpush1.bf16.msra.mxu0 0
    %1320 = vmatprep.subr.bf16.mxu0 0
    %1321 = vmatpush1.bf16.msra.mxu0 0
    %1322 = vmatprep.subr.bf16.mxu0 0
    %1323 = vmatpush1.bf16.msra.mxu0 0
    %1324 = vmatprep.subr.bf16.mxu0 0
    %1325 = vmatpush1.bf16.msra.mxu0 0
    %1326 = vmatprep.subr.bf16.mxu0 0
    %1327 = vmatpush1.bf16.msra.mxu0 0
    %1328 = vmatprep.mubr.bf16.mxu0 0
    %1329 = vmatmul.mubr.bf16.gmra.mrb[0].mxu0 %v1219
    %v1330 = vpop.f32.mrb[0].mxu0
    %v1331 = vadd.f32 %v1143, %v1330
    %v1332 = vpop.f32.mrb[0].mxu0
    %v1333 = vadd.f32 %v1143, %v1332
    %v1334 = vpop.f32.mrb[0].mxu0
    %v1335 = vadd.f32 %v1148, %v1334
    %v1336 = vpop.f32.mrb[0].mxu0
    %v1337 = vadd.f32 %v1148, %v1336
    %1338 = vmatprep.mubr.bf16.mxu0 0
    %1339 = vmatmul.mubr.bf16.gmra.mrb[0].mxu0 %v1222
    %v1340 = vpop.f32.mrb[0].mxu0
    %v1341 = vadd.f32 %v1153, %v1340
    %v1342 = vpop.f32.mrb[0].mxu0
    %v1343 = vadd.f32 %v1153, %v1342
    %v1344 = vpop.f32.mrb[0].mxu0
    %v1345 = vadd.f32 %v1158, %v1344
    %v1346 = vpop.f32.mrb[0].mxu0
    %v1347 = vadd.f32 %v1158, %v1346
    %1348 = vdwg.mxu0
    %1349 = vmatprep.subr.bf16.mxu0 0
    %1350 = vmatpush1.bf16.msra.mxu0 %v1206
    %1351 = vmatprep.subr.bf16.mxu0 0
    %1352 = vmatpush1.bf16.msra.mxu0 %v1241
    %1353 = vmatprep.subr.bf16.mxu0 0
    %1354 = vmatpush1.bf16.msra.mxu0 0
    %1355 = vmatprep.subr.bf16.mxu0 0
    %1356 = vmatpush1.bf16.msra.mxu0 0
    %1357 = vmatprep.subr.bf16.mxu0 0
    %1358 = vmatpush1.bf16.msra.mxu0 0
    %1359 = vmatprep.subr.bf16.mxu0 0
    %1360 = vmatpush1.bf16.msra.mxu0 0
    %1361 = vmatprep.subr.bf16.mxu0 0
    %1362 = vmatpush1.bf16.msra.mxu0 0
    %1363 = vmatprep.subr.bf16.mxu0 0
    %1364 = vmatpush1.bf16.msra.mxu0 0
    %1365 = vmatprep.subr.bf16.mxu0 0
    %1366 = vmatpush1.bf16.msra.mxu0 0
    %1367 = vmatprep.subr.bf16.mxu0 0
    %1368 = vmatpush1.bf16.msra.mxu0 0
    %1369 = vmatprep.subr.bf16.mxu0 0
    %1370 = vmatpush1.bf16.msra.mxu0 0
    %1371 = vmatprep.subr.bf16.mxu0 0
    %1372 = vmatpush1.bf16.msra.mxu0 0
    %1373 = vmatprep.subr.bf16.mxu0 0
    %1374 = vmatpush1.bf16.msra.mxu0 0
    %1375 = vmatprep.subr.bf16.mxu0 0
    %1376 = vmatpush1.bf16.msra.mxu0 0
    %1377 = vmatprep.subr.bf16.mxu0 0
    %1378 = vmatpush1.bf16.msra.mxu0 0
    %1379 = vmatprep.subr.bf16.mxu0 0
    %1380 = vmatpush1.bf16.msra.mxu0 0
    %1381 = vmatprep.mubr.bf16.mxu0 0
    %1382 = vmatmul.mubr.bf16.gmra.mrb[0].mxu0 %v1219
    %v1383 = vpop.f32.mrb[0].mxu0
    %v1384 = vadd.f32 %v1143, %v1383
    %v1385 = vpop.f32.mrb[0].mxu0
    %v1386 = vpop.f32.mrb[0].mxu0
    %v1387 = vadd.f32 %v1148, %v1386
    %v1388 = vpop.f32.mrb[0].mxu0
    %1389 = vmatprep.mubr.bf16.mxu0 0
    %1390 = vmatmul.mubr.bf16.gmra.mrb[0].mxu0 %v1222
    %v1391 = vpop.f32.mrb[0].mxu0
    %v1392 = vadd.f32 %v1153, %v1391
    %v1393 = vpop.f32.mrb[0].mxu0
    %v1394 = vpop.f32.mrb[0].mxu0
    %v1395 = vadd.f32 %v1158, %v1394
    %v1396 = vpop.f32.mrb[0].mxu0
    %1397 = vdwg.mxu0
    %v1398 = vmax.f32 %v1278, 0.0
    %v1399 = vmax.f32 %v1280, 0.0
    %v1400 = vmax.f32 %v1331, 0.0
    %v1401 = vmax.f32 %v1333, 0.0
    %v1402 = vmax.f32 %v1384, 0.0
    %v1403 = vmax.f32 %v1282, 0.0
    %v1404 = vmax.f32 %v1284, 0.0
    %v1405 = vmax.f32 %v1335, 0.0
    %v1406 = vmax.f32 %v1337, 0.0
    %v1407 = vmax.f32 %v1387, 0.0
    %v1408 = vmax.f32 %v1288, 0.0
    %v1409 = vmax.f32 %v1290, 0.0
    %v1410 = vmax.f32 %v1341, 0.0
    %v1411 = vmax.f32 %v1343, 0.0
    %v1412 = vmax.f32 %v1392, 0.0
    %v1413 = vmax.f32 %v1292, 0.0
    %v1414 = vmax.f32 %v1294, 0.0
    %v1415 = vmax.f32 %v1345, 0.0
    %v1416 = vmax.f32 %v1347, 0.0
    %v1417 = vmax.f32 %v1395, 0.0
    %v1418 = vadd.f32 %v1398, %v1399
    %1419 = vadd.xlane.f32.xlu0 %v1418
    %v1420 = vpop.xlane.xlu0 %1419
    %v1421 = vadd.f32 %v1403, %v1404
    %1422 = vadd.xlane.f32.xlu0 %v1421
    %v1423 = vpop.xlane.xlu0 %1422
    %v1424 = vadd.f32 %v1408, %v1409
    %1425 = vadd.xlane.f32.xlu0 %v1424
    %v1426 = vpop.xlane.xlu0 %1425
    %v1427 = vadd.f32 %v1413, %v1414
    %1428 = vadd.xlane.f32.xlu0 %v1427
    %v1429 = vpop.xlane.xlu0 %1428
    %1442 = vrot.lane.b32.xlu0 %v1400, 94
    %v1443 = vpop.permute.xlu0 %1442
    %1444 = vrot.lane.b32.xlu0 %v1401, 94
    %v1445 = vpop.permute.xlu0 %1444
    %1446 = vrot.lane.b32.xlu0 %v1402, 94
    %v1447 = vpop.permute.xlu0 %1446
    %1448 = vrot.lane.b32.xlu0 %v1405, 94
    %v1449 = vpop.permute.xlu0 %1448
    %1450 = vrot.lane.b32.xlu0 %v1406, 94
    %v1451 = vpop.permute.xlu0 %1450
    %1452 = vrot.lane.b32.xlu0 %v1407, 94
    %v1453 = vpop.permute.xlu0 %1452
    %1454 = vrot.lane.b32.xlu0 %v1410, 94
    %v1455 = vpop.permute.xlu0 %1454
    %1456 = vrot.lane.b32.xlu0 %v1411, 94
    %v1457 = vpop.permute.xlu0 %1456
    %1458 = vrot.lane.b32.xlu0 %v1412, 94
    %v1459 = vpop.permute.xlu0 %1458
    %1460 = vrot.lane.b32.xlu0 %v1415, 94
    %v1461 = vpop.permute.xlu0 %1460
    %1462 = vrot.lane.b32.xlu0 %v1416, 94
    %v1463 = vpop.permute.xlu0 %1462
    %1464 = vrot.lane.b32.xlu0 %v1417, 94
    %v1465 = vpop.permute.xlu0 %1464
    %vm1466 = vcmask 769024
    %v1467 = vsel %vm1466, %v1443, %v1445
    %v1468 = vsel %vm1466, %v1445, %v1447
    %v1469 = vsel %vm1466, %v1449, %v1451
    %v1470 = vsel %vm1466, %v1451, %v1453
    %v1471 = vsel %vm1466, %v1455, %v1457
    %v1472 = vsel %vm1466, %v1457, %v1459
    %v1473 = vsel %vm1466, %v1461, %v1463
    %v1474 = vsel %vm1466, %v1463, %v1465
    %v1483 = vadd.f32 %v1467, %v1468
    %1484 = vadd.xlane.f32.xlu0 %v1483
    %v1485 = vpop.xlane.xlu0 %1484
    %v1486 = vadd.f32 %v1469, %v1470
    %1487 = vadd.xlane.f32.xlu0 %v1486
    %v1488 = vpop.xlane.xlu0 %1487
    %v1489 = vadd.f32 %v1471, %v1472
    %1490 = vadd.xlane.f32.xlu0 %v1489
    %v1491 = vpop.xlane.xlu0 %1490
    %v1492 = vadd.f32 %v1473, %v1474
    %1493 = vadd.xlane.f32.xlu0 %v1492
    %v1494 = vpop.xlane.xlu0 %1493
    %vm1495 = vcmask 7168
    %v1496 = vsel %vm1495, %v1420, %v1485
    %v1497 = vsel %vm1495, %v1423, %v1488
    %v1498 = vsel %vm1495, %v1426, %v1491
    %v1499 = vsel %vm1495, %v1429, %v1494
    %1500 = vxpose.xlu0.b32.start [1/16] %v1496, 128
    %1501 = vxpose.xlu0.b32.cont [2/16] %v1497, 128
    %1502 = vxpose.xlu0.b32.cont [3/16] %v1498, 128
    %1503 = vxpose.xlu0.b32.cont [4/16] %v1499, 128
    %1504 = vxpose.xlu0.b32.cont [5/16] 0.0, 128
    %1505 = vxpose.xlu0.b32.cont [6/16] 0.0, 128
    %1506 = vxpose.xlu0.b32.cont [7/16] 0.0, 128
    %1507 = vxpose.xlu0.b32.cont [8/16] 0.0, 128
    %1508 = vxpose.xlu0.b32.cont [9/16] 0.0, 128
    %1509 = vxpose.xlu0.b32.cont [10/16] 0.0, 128
    %1510 = vxpose.xlu0.b32.cont [11/16] 0.0, 128
    %1511 = vxpose.xlu0.b32.cont [12/16] 0.0, 128
    %1512 = vxpose.xlu0.b32.cont [13/16] 0.0, 128
    %1513 = vxpose.xlu0.b32.cont [14/16] 0.0, 128
    %1514 = vxpose.xlu0.b32.cont [15/16] 0.0, 128
    %1515 = vxpose.xlu0.b32.end [16/16] 0.0, 128
    %v1516 = vpop.trf.xlu0
    %v1517 = vpop.trf.xlu0
    %v1518 = vpop.trf.xlu0
    %v1519 = vpop.trf.xlu0
    %v1520 = vpop.trf.xlu0
    %v1521 = vpop.trf.xlu0
    %v1522 = vpop.trf.xlu0
    %v1523 = vpop.trf.xlu0
    %v1524 = vpop.trf.xlu0
    %v1525 = vpop.trf.xlu0
    %v1526 = vpop.trf.xlu0
    %v1527 = vpop.trf.xlu0
    %v1528 = vpop.trf.xlu0
    %v1529 = vpop.trf.xlu0
    %v1530 = vpop.trf.xlu0
    %v1531 = vpop.trf.xlu0
    %v1532 = vmul.f32 %v1516, 0.00390625
    %v1533 = vld [vmem:[#allocation10] sm:$0xff]
    %v1534 = vld [vmem:[#allocation10 + $0x8] sm:$0xff]
    %v1535 = vld [vmem:[#allocation10 + $0x10] sm:$0xff]
    %v1536 = vld [vmem:[#allocation10 + $0x18] sm:$0xff]
    %v1537 = vld [vmem:[#allocation10 + $0x20] sm:$0xff]
    %v1538 = vld [vmem:[#allocation10 + $0x28] sm:$0xff]
    %v1539 = vld [vmem:[#allocation10 + $0x30] sm:$0xff]
    %v1540 = vld [vmem:[#allocation10 + $0x38] sm:$0xff]
    %v1541 = vld [vmem:[#allocation10 + $0x40] sm:$0xff]
    %v1542 = vld [vmem:[#allocation10 + $0x48] sm:$0xff]
    %v1543 = vld [vmem:[#allocation10 + $0x50] sm:$0xff]
    %v1544 = vld [vmem:[#allocation10 + $0x58] sm:$0xff]
    %v1545 = vld [vmem:[#allocation12] sm:$0x7]
    %v1547 = vlaneseq
    %v1548 = vshrl.u32 %v1547, 7
    %v1549 = vsub.s32 0, %v1548
    %v1550 = vrot.slane %v1545, %v1549
    %v1551 = vlaneseq
    %v1552 = vshrl.u32 %v1551, 7
    %v1553 = vsub.s32 1, %v1552
    %v1554 = vrot.slane %v1545, %v1553
    %v1555 = vlaneseq
    %v1556 = vshrl.u32 %v1555, 7
    %v1557 = vsub.s32 2, %v1556
    %v1558 = vrot.slane %v1545, %v1557
    %vm1562 = vcmask 261120
    %v1564 = vsel %vm1562, %v1532, 0
    %1566 = vmatprep.subr.mxu0 %v1534
    %1567 = vmatpush1.msra.mxu0 %v1533
    %1568 = vmatprep.subr.mxu0 %v1537
    %1569 = vmatpush1.msra.mxu0 %v1536
    %1570 = vmatprep.subr.mxu0 %v1540
    %1571 = vmatpush1.msra.mxu0 %v1539
    %1572 = vmatprep.subr.mxu0 %v1543
    %1573 = vmatpush1.msra.mxu0 %v1542
    %1574 = vmatprep.subr.mxu0 0.0
    %1575 = vmatpush1.msra.mxu0 0.0
    %1576 = vmatprep.subr.mxu0 0.0
    %1577 = vmatpush1.msra.mxu0 0.0
    %1578 = vmatprep.subr.mxu0 0.0
    %1579 = vmatpush1.msra.mxu0 0.0
    %1580 = vmatprep.subr.mxu0 0.0
    %1581 = vmatpush1.msra.mxu0 0.0
    %1582 = vmatprep.subr.mxu0 0.0
    %1583 = vmatpush1.msra.mxu0 0.0
    %1584 = vmatprep.subr.mxu0 0.0
    %1585 = vmatpush1.msra.mxu0 0.0
    %1586 = vmatprep.subr.mxu0 0.0
    %1587 = vmatpush1.msra.mxu0 0.0
    %1588 = vmatprep.subr.mxu0 0.0
    %1589 = vmatpush1.msra.mxu0 0.0
    %1590 = vmatprep.subr.mxu0 0.0
    %1591 = vmatpush1.msra.mxu0 0.0
    %1592 = vmatprep.subr.mxu0 0.0
    %1593 = vmatpush1.msra.mxu0 0.0
    %1594 = vmatprep.subr.mxu0 0.0
    %1595 = vmatpush1.msra.mxu0 0.0
    %1596 = vmatprep.subr.mxu0 0.0
    %1597 = vmatpush1.msra.mxu0 0.0
    %1598 = vmatprep.subr.mxu0 0.0
    %1599 = vmatpush1.msra.mxu0 0.0
    %1600 = vmatprep.subr.mxu0 0.0
    %1601 = vmatpush1.msra.mxu0 0.0
    %1602 = vmatprep.subr.mxu0 0.0
    %1603 = vmatpush1.msra.mxu0 0.0
    %1604 = vmatprep.subr.mxu0 0.0
    %1605 = vmatpush1.msra.mxu0 0.0
    %1606 = vmatprep.subr.mxu0 0.0
    %1607 = vmatpush1.msra.mxu0 0.0
    %1608 = vmatprep.subr.mxu0 0.0
    %1609 = vmatpush1.msra.mxu0 0.0
    %1610 = vmatprep.subr.mxu0 0.0
    %1611 = vmatpush1.msra.mxu0 0.0
    %1612 = vmatprep.subr.mxu0 0.0
    %1613 = vmatpush1.msra.mxu0 0.0
    %1614 = vmatprep.subr.mxu0 0.0
    %1615 = vmatpush1.msra.mxu0 0.0
    %1616 = vmatprep.subr.mxu0 0.0
    %1617 = vmatpush1.msra.mxu0 0.0
    %1618 = vmatprep.subr.mxu0 0.0
    %1619 = vmatpush1.msra.mxu0 0.0
    %1620 = vmatprep.subr.mxu0 0.0
    %1621 = vmatpush1.msra.mxu0 0.0
    %1622 = vmatprep.subr.mxu0 0.0
    %1623 = vmatpush1.msra.mxu0 0.0
    %1624 = vmatprep.subr.mxu0 0.0
    %1625 = vmatpush1.msra.mxu0 0.0
    %1626 = vmatprep.subr.mxu0 0.0
    %1627 = vmatpush1.msra.mxu0 0.0
    %1628 = vmatprep.subr.mxu0 0.0
    %1629 = vmatpush1.msra.mxu0 0.0
    %1630 = vmatprep.mubr.f32.mxu0 0.0
    %1631 = vmatmul.mubr.f32.gmra.mrb[0].mxu0 %v1564
    %v1632 = vpop.f32.mrb[0].mxu0
    %v1633 = vadd.f32 %v1550, %v1632
    %v1634 = vpop.f32.mrb[0].mxu0
    %v1635 = vadd.f32 %v1554, %v1634
    %1636 = vdwg.mxu0
    %1637 = vmatprep.subr.mxu0 0.0
    %1638 = vmatpush1.msra.mxu0 %v1535
    %1639 = vmatprep.subr.mxu0 0.0
    %1640 = vmatpush1.msra.mxu0 %v1538
    %1641 = vmatprep.subr.mxu0 0.0
    %1642 = vmatpush1.msra.mxu0 %v1541
    %1643 = vmatprep.subr.mxu0 0.0
    %1644 = vmatpush1.msra.mxu0 %v1544
    %1645 = vmatprep.subr.mxu0 0.0
    %1646 = vmatpush1.msra.mxu0 0.0
    %1647 = vmatprep.subr.mxu0 0.0
    %1648 = vmatpush1.msra.mxu0 0.0
    %1649 = vmatprep.subr.mxu0 0.0
    %1650 = vmatpush1.msra.mxu0 0.0
    %1651 = vmatprep.subr.mxu0 0.0
    %1652 = vmatpush1.msra.mxu0 0.0
    %1653 = vmatprep.subr.mxu0 0.0
    %1654 = vmatpush1.msra.mxu0 0.0
    %1655 = vmatprep.subr.mxu0 0.0
    %1656 = vmatpush1.msra.mxu0 0.0
    %1657 = vmatprep.subr.mxu0 0.0
    %1658 = vmatpush1.msra.mxu0 0.0
    %1659 = vmatprep.subr.mxu0 0.0
    %1660 = vmatpush1.msra.mxu0 0.0
    %1661 = vmatprep.subr.mxu0 0.0
    %1662 = vmatpush1.msra.mxu0 0.0
    %1663 = vmatprep.subr.mxu0 0.0
    %1664 = vmatpush1.msra.mxu0 0.0
    %1665 = vmatprep.subr.mxu0 0.0
    %1666 = vmatpush1.msra.mxu0 0.0
    %1667 = vmatprep.subr.mxu0 0.0
    %1668 = vmatpush1.msra.mxu0 0.0
    %1669 = vmatprep.subr.mxu0 0.0
    %1670 = vmatpush1.msra.mxu0 0.0
    %1671 = vmatprep.subr.mxu0 0.0
    %1672 = vmatpush1.msra.mxu0 0.0
    %1673 = vmatprep.subr.mxu0 0.0
    %1674 = vmatpush1.msra.mxu0 0.0
    %1675 = vmatprep.subr.mxu0 0.0
    %1676 = vmatpush1.msra.mxu0 0.0
    %1677 = vmatprep.subr.mxu0 0.0
    %1678 = vmatpush1.msra.mxu0 0.0
    %1679 = vmatprep.subr.mxu0 0.0
    %1680 = vmatpush1.msra.mxu0 0.0
    %1681 = vmatprep.subr.mxu0 0.0
    %1682 = vmatpush1.msra.mxu0 0.0
    %1683 = vmatprep.subr.mxu0 0.0
    %1684 = vmatpush1.msra.mxu0 0.0
    %1685 = vmatprep.subr.mxu0 0.0
    %1686 = vmatpush1.msra.mxu0 0.0
    %1687 = vmatprep.subr.mxu0 0.0
    %1688 = vmatpush1.msra.mxu0 0.0
    %1689 = vmatprep.subr.mxu0 0.0
    %1690 = vmatpush1.msra.mxu0 0.0
    %1691 = vmatprep.subr.mxu0 0.0
    %1692 = vmatpush1.msra.mxu0 0.0
    %1693 = vmatprep.subr.mxu0 0.0
    %1694 = vmatpush1.msra.mxu0 0.0
    %1695 = vmatprep.subr.mxu0 0.0
    %1696 = vmatpush1.msra.mxu0 0.0
    %1697 = vmatprep.subr.mxu0 0.0
    %1698 = vmatpush1.msra.mxu0 0.0
    %1699 = vmatprep.subr.mxu0 0.0
    %1700 = vmatpush1.msra.mxu0 0.0
    %1701 = vmatprep.mubr.f32.mxu0 0.0
    %1702 = vmatmul.mubr.f32.gmra.mrb[0].mxu0 %v1564
    %v1703 = vpop.f32.mrb[0].mxu0
    %v1704 = vadd.f32 %v1558, %v1703
    %v1705 = vpop.f32.mrb[0].mxu0
    %1706 = vdwg.mxu0
    %v1710 = vcombine.low %v1633, %v1635
    %v1712 = vunpack.c.l.s4 1983009808
    %v1713 = vunpack.c.0.s8 %v1712
    %v1714 = vlaneseq
    %v1715 = vshrl.u32 %v1714, 7
    %v1716 = vsub.s32 %v1713, %v1715
    %v1717 = vrot.slane %v1710, %v1716
    %v1719 = vunpack.c.l.s4 1983009808
    %v1720 = vunpack.c.0.s8 %v1719
    %v1721 = vlaneseq
    %v1722 = vshrl.u32 %v1721, 7
    %v1723 = vsub.s32 %v1720, %v1722
    %v1724 = vrot.slane %v1704, %v1723
    %v1725 = vcombine.low %v1717, %v1724
    %vm1727 = vcmask 1041408
    %vm1728 = vcmask 1043458
    %vm1729 = vmor %vm1728, %vm1727
    %vm1730 = vcmask 5124
    %vm1731 = vmor %vm1730, %vm1729
    %1732 = vst.msk [vmem:[#allocation13] sm:$0x3f] %vm1731, %v1725
    // Predicated region
    $region42: #{tpu_custom_call.1} parent=1 // pred_check
      _
    $region43: #{tpu_custom_call.1} parent=1 // pred_check_branch
      %1734 = sbr.rel (0) target = $region45
    $region44: #{tpu_custom_call.1} parent=1 // pred_region
      %s1736 = ssub.s32 96, 96
      %1737 = vsyncadd [#allocation6], %s1736
      %s1739 = sshll.u32 [#allocation13], 4
      %s1740 = int_to_ptr.vmem [resolvable:$true] %s1739
      %1742 = dma.vmem_to_hbm [thread:$0]  %s1740, 96, %s5, [#allocation6]
    $region45: #{tpu_custom_call.1} parent=1 // pred_fallthru
      _
    // Predicated region
    $region46: #{tpu_custom_call.1} parent=1 // pred_check
      _
    $region47: #{tpu_custom_call.1} parent=1 // pred_check_branch
      %1744 = sbr.rel (0) target = $region49
    $region48: #{tpu_custom_call.1} parent=1 // pred_region
      %1745 = dma.done [#allocation6], 96
    $region49: #{tpu_custom_call.1} parent=1 // pred_fallthru
      _
    %1746 = vsyncpa [#allocation5], 1
    %1747 = vsyncpa [#allocation8], 1
    %1748 = vsyncpa [#allocation11], 1
    %1749 = vsyncpa [#allocation6], 1

</llo_original>
